<compile_context>
chip_gen: v5e
topology: v5e:2x2
jax: 0.10.0
libtpu: 0.0.40
codegen_flags: <defaults>
</compile_context>

<pallas_src>
import jax
import jax.numpy as jnp
import numpy as np
from jax import lax
from jax.experimental import pallas as pl
from jax.experimental.pallas import tpu as pltpu


# ----------------------------- Pallas kernel -----------------------------

def _make_decoder_kernel(D, H, W, Cout):
    S = D * H * W
    C8 = 8 * Cout
    inv_count = 1.0 / (8 * Cout * S)

    def kernel(x_ref, wbig_ref, wnb_ref, g_ref, be_ref, o_ref):
        # x_ref   : (Cin+1, S)        last row == 1.0 (carries all folded biases via the matmul)
        # wbig_ref: (9*Cout, Cin+1)   rows [A_0 | c_0 ; ... ; A_7 | c_7 ; Wup' | 0]
        # wnb_ref : (6, S)            trilinear neighbour weights, rows [(w,0),(w,1),(h,0),(h,1),(d,0),(d,1)]
        # o_ref   : (8, Cout, S)      polyphase output (phase p = rd*4 + rh*2 + rw)
        x = x_ref[...]

        # --- ONE stacked matmul: every 1x1 conv of both branches + the concat conv + all biases ---
        hfull = jnp.dot(wbig_ref[...], x, preferred_element_type=jnp.float32)   # (9*Cout, S)
        y = hfull[C8:C8 + Cout, :]                      # upsample branch (pre-interpolation)
        for p in range(8):                              # stage ps-branch phases in the output block
            o_ref[p] = hfull[p * Cout:(p + 1) * Cout, :]

        def interp(v, k, row, phase):
            # phase 0: neighbour at flat index pos-k (clamped at low edge);
            # phase 1: neighbour at flat index pos+k (clamped at high edge).
            nb = pltpu.roll(v, shift=(k if phase == 0 else S - k), axis=1)   # XLU rotate (free slot)
            wn = wnb_ref[row + phase:row + phase + 1, :]                     # 0 at borders, 0.25 else
            return v + wn * (nb - v)                    # == 0.75*v + 0.25*nb away from borders

        # separable x2 trilinear upsample expressed per output phase at the INPUT resolution
        yw = [interp(y, 1, 0, rw) for rw in range(2)]
        yhw = [[interp(v, W, 2, rh) for rh in range(2)] for v in yw]          # [rw][rh]

        # ---- pass 1: add upsample branch per phase, accumulate GroupNorm partials in one sweep ----
        vsum = jnp.zeros((Cout, S), jnp.float32)
        vsq = jnp.zeros((Cout, S), jnp.float32)
        for rd in range(2):
            for rh in range(2):
                for rw in range(2):
                    p = rd * 4 + rh * 2 + rw
                    z = o_ref[p] + interp(yhw[rw][rh], W * H, 4, rd)
                    o_ref[p] = z
                    vsum = vsum + z
                    vsq = vsq + z * z

        # ---- GroupNorm(1 group) statistics (single pass) with folded affine ----
        mean = jnp.sum(vsum) * inv_count
        var = jnp.sum(vsq) * inv_count - mean * mean
        inv_std = lax.rsqrt(var + 1e-5)
        gp = g_ref[...] * inv_std                       # (Cout, 1)
        bp = be_ref[...] - mean * gp                    # (Cout, 1)
        gp_b = jnp.broadcast_to(gp, (Cout, S))          # hoisted broadcasts (not CSE'd otherwise)
        bp_b = jnp.broadcast_to(bp, (Cout, S))

        # ---- pass 2: one FMA + clip (ReLU6) per element ----
        for p in range(8):
            o_ref[p] = jnp.clip(o_ref[p] * gp_b + bp_b, 0.0, 6.0)

    return kernel


# ----------------------------- wrapper -----------------------------

def multi_decoder3d(x_ncdhw, params):
    """Forward pass of MultiDecoder3D (default config). Input/Output are NCDHW float32."""
    x = x_ncdhw.astype(jnp.float32)
    N, Cin, D, H, W = x.shape
    S = D * H * W
    Cq = Cin // 4
    Cout = params["w_up"].shape[0]

    # ---- offline folding of the whole 1x1-conv chain (wrapper side, tiny) ----
    w1 = params["w_ps_pre"].reshape(2 * Cin, Cin).astype(jnp.float32)   # rows = c*8 + phase
    b1 = params["b_ps_pre"].reshape(2 * Cin).astype(jnp.float32)
    w2 = params["w_ps_post"].reshape(Cout, Cq).astype(jnp.float32)
    b2 = params["b_ps_post"].reshape(Cout).astype(jnp.float32)
    w3 = params["w_up"].reshape(Cout, Cin).astype(jnp.float32)
    b3 = params["b_up"].reshape(Cout).astype(jnp.float32)
    wc = params["w_cat"].reshape(Cout, 2 * Cout).astype(jnp.float32)
    b4 = params["b_cat"].reshape(Cout).astype(jnp.float32)
    w4a, w4b = wc[:, :Cout], wc[:, Cout:]               # ps-branch half / upsample-branch half

    w1p = w1.reshape(Cq, 8, Cin).transpose(1, 0, 2)     # (8, Cq, Cin) phase-major
    b1p = b1.reshape(Cq, 8).T                           # (8, Cq)
    w42 = w4a @ w2                                      # (Cout, Cq)
    A = jnp.einsum('oc,pci->poi', w42, w1p)             # (8, Cout, Cin)  = W4a @ W2 @ W1_p
    cshared = w4a @ b2 + w4b @ b3 + b4                  # (Cout,)
    cp = jnp.einsum('oc,pc->po', w42, b1p) + cshared[None, :]   # (8, Cout) folded per-phase bias
    wup = w4b @ w3                                      # (Cout, Cin)     = W4b @ W3

    wbig = jnp.concatenate([
        jnp.concatenate([A.reshape(8 * Cout, Cin), cp.reshape(8 * Cout, 1)], axis=1),
        jnp.concatenate([wup, jnp.zeros((Cout, 1), jnp.float32)], axis=1),
    ], axis=0)                                          # (9*Cout, Cin+1)

    # ---- precomputed trilinear neighbour weights per axis / phase (edge-clamped) ----
    s = jnp.arange(S, dtype=jnp.int32)
    w_i, h_i, d_i = s % W, (s // W) % H, s // (W * H)

    def nbw(idx, n):
        return (jnp.where(idx == 0, 0.0, 0.25),         # phase 0: neighbour at pos-1
                jnp.where(idx == n - 1, 0.0, 0.25))     # phase 1: neighbour at pos+1

    wnb = jnp.stack([*nbw(w_i, W), *nbw(h_i, H), *nbw(d_i, D)], axis=0).astype(jnp.float32)  # (6, S)

    gamma = params["gamma"].reshape(Cout, 1).astype(jnp.float32)
    beta = params["beta"].reshape(Cout, 1).astype(jnp.float32)

    # channels-first, flattened spatial + a constant ones-row (drives the folded biases)
    xa = jnp.concatenate([x.reshape(N, Cin, S), jnp.ones((N, 1, S), jnp.float32)], axis=1)

    kernel = _make_decoder_kernel(D, H, W, Cout)
    small = [wbig, wnb, gamma, beta]

    def _full(a):
        nd = a.ndim
        return pl.BlockSpec(a.shape, lambda n, _nd=nd: (0,) * _nd)

    out_poly = pl.pallas_call(
        kernel,
        out_shape=jax.ShapeDtypeStruct((N, 8, Cout, S), jnp.float32),
        grid=(N,),
        in_specs=[pl.BlockSpec((None, Cin + 1, S), lambda n: (n, 0, 0))] + [_full(a) for a in small],
        out_specs=pl.BlockSpec((None, 8, Cout, S), lambda n: (n, 0, 0, 0)),
        compiler_params=pltpu.CompilerParams(dimension_semantics=("parallel",)),
    )(xa, *small)

    # Interleave the 8 polyphase outputs (p = rd*4 + rh*2 + rw) back to (N, Cout, 2D, 2H, 2W).
    # Note: this XLA transpose is one extra HBM read+write of the output — noise at this size;
    # keep the polyphase layout for the consumer if the kernel is scaled up.
    out = out_poly.reshape(N, 2, 2, 2, Cout, D, H, W)
    out = jnp.transpose(out, (0, 4, 5, 1, 6, 2, 7, 3))
    return out.reshape(N, Cout, 2 * D, 2 * H, 2 * W)


# ----------------------------- pure-JAX reference -----------------------------

def _conv1x1(v, w, b):
    return jnp.einsum('oc,ncdhw->nodhw', w.reshape(w.shape[0], -1), v) \
        + b.reshape(1, -1, 1, 1, 1)


def _pixel_shuffle_3d(x, r=2):
    N, C, D, H, W = x.shape
    c = C // (r ** 3)
    x = x.reshape(N, c, r, r, r, D, H, W)
    x = jnp.transpose(x, (0, 1, 5, 2, 6, 3, 7, 4))
    return x.reshape(N, c, D * r, H * r, W * r)


def _trilinear_up2(x):
    """PyTorch Upsample(scale_factor=2, mode='trilinear', align_corners=False)."""
    def axis_up(v, axis):
        n = v.shape[axis]
        o = jnp.arange(2 * n, dtype=jnp.float32)
        src = jnp.maximum((o + 0.5) / 2.0 - 0.5, 0.0)
        lo = jnp.floor(src)
        frac = src - lo
        lo_i = lo.astype(jnp.int32)
        hi_i = jnp.minimum(lo_i + 1, n - 1)
        vl = jnp.take(v, lo_i, axis=axis)
        vh = jnp.take(v, hi_i, axis=axis)
        shape = [1] * v.ndim
        shape[axis] = 2 * n
        frac = frac.reshape(shape)
        return vl * (1.0 - frac) + vh * frac
    for ax in (2, 3, 4):
        x = axis_up(x, ax)
    return x


def _reference(x_ncdhw, params):
    x = x_ncdhw.astype(jnp.float32)
    ps = _conv1x1(x, params["w_ps_pre"], params["b_ps_pre"])
    ps = _pixel_shuffle_3d(ps, 2)
    ps = _conv1x1(ps, params["w_ps_post"], params["b_ps_post"])
    up = _trilinear_up2(x)
    up = _conv1x1(up, params["w_up"], params["b_up"])
    cat = jnp.concatenate([ps, up], axis=1)
    out = _conv1x1(cat, params["w_cat"], params["b_cat"])
    mean = jnp.mean(out, axis=(1, 2, 3, 4), keepdims=True)
    var = jnp.mean((out - mean) ** 2, axis=(1, 2, 3, 4), keepdims=True)
    out = (out - mean) * lax.rsqrt(var + 1e-5)
    out = out * params["gamma"].reshape(1, -1, 1, 1, 1) + params["beta"].reshape(1, -1, 1, 1, 1)
    return jnp.clip(out, 0.0, 6.0)


# ----------------------------- main -----------------------------

if __name__ == "__main__":
    key = jax.random.PRNGKey(0)
    ks = jax.random.split(key, 11)
    N, Cin, Cout = 2, 8, 8          # Cin must be divisible by 4 (pixel-shuffle path)
    D = H = W = 8                   # output spatial = 16^3 ; S = D*H*W = 512 (lane-dense)
    Cq = Cin // 4

    x = jax.random.normal(ks[0], (N, Cin, D, H, W), jnp.float32)

    params = {
        # PyTorch Conv3d weight layouts (O, I, kD, kH, kW), all kernels are 1x1x1
        "w_ps_pre":  jax.random.normal(ks[1], (2 * Cin, Cin, 1, 1, 1), jnp.float32) * 0.1,
        "b_ps_pre":  jax.random.normal(ks[2], (2 * Cin,), jnp.float32) * 0.1,
        "w_ps_post": jax.random.normal(ks[3], (Cout, Cq, 1, 1, 1), jnp.float32) * 0.1,
        "b_ps_post": jax.random.normal(ks[4], (Cout,), jnp.float32) * 0.1,
        "w_up":      jax.random.normal(ks[5], (Cout, Cin, 1, 1, 1), jnp.float32) * 0.1,
        "b_up":      jax.random.normal(ks[6], (Cout,), jnp.float32) * 0.1,
        "w_cat":     jax.random.normal(ks[7], (Cout, 2 * Cout, 1, 1, 1), jnp.float32) * 0.1,
        "b_cat":     jax.random.normal(ks[8], (Cout,), jnp.float32) * 0.1,
        # GroupNorm(1, Cout) affine
        "gamma": 1.0 + 0.1 * jax.random.normal(ks[9], (Cout,), jnp.float32),
        "beta":        0.1 * jax.random.normal(ks[10], (Cout,), jnp.float32),
    }

    out = jax.jit(multi_decoder3d)(x, params)
    out = jax.block_until_ready(out)

    ref = _reference(x, params)
    np.testing.assert_allclose(np.asarray(out), np.asarray(ref), rtol=2e-4, atol=2e-4)
    assert out.shape == (N, Cout, 2 * D, 2 * H, 2 * W)
    print("KERNEL_OK")
</pallas_src>

<mosaic_0001>
module attributes {stable_mosaic.version = 11 : i64} {
  func.func @kernel(%arg0: i32, %arg1: memref<1x9x512xf32, #tpu.memory_space<vmem>>, %arg2: memref<72x9xf32, #tpu.memory_space<vmem>>, %arg3: memref<6x512xf32, #tpu.memory_space<vmem>>, %arg4: memref<8x1xf32, #tpu.memory_space<vmem>>, %arg5: memref<8x1xf32, #tpu.memory_space<vmem>>, %arg6: memref<1x8x8x512xf32, #tpu.memory_space<vmem>>) attributes {dimension_semantics = [#tpu.dimension_semantics<parallel>], iteration_bounds = array<i64: 2>, scalar_prefetch = 0 : i64, scratch_operands = 0 : i64, tpu.core_type = #tpu.core_type<tc>, window_params = [{transform_indices = @transform_0, window_bounds = array<i64: 1, 9, 512>}, {pipeline_mode = #tpu.pipeline_mode<synchronous>, transform_indices = @transform_1, window_bounds = array<i64: 72, 9>}, {pipeline_mode = #tpu.pipeline_mode<synchronous>, transform_indices = @transform_2, window_bounds = array<i64: 6, 512>}, {pipeline_mode = #tpu.pipeline_mode<synchronous>, transform_indices = @transform_3, window_bounds = array<i64: 8, 1>}, {pipeline_mode = #tpu.pipeline_mode<synchronous>, transform_indices = @transform_4, window_bounds = array<i64: 8, 1>}, {transform_indices = @transform_5, window_bounds = array<i64: 1, 8, 8, 512>}]} {
    %c0 = arith.constant 0 : index
    %c0_0 = arith.constant 0 : index
    %c0_1 = arith.constant 0 : index
    %0 = vector.load %arg1[%c0, %c0_0, %c0_1] : memref<1x9x512xf32, #tpu.memory_space<vmem>>, vector<1x9x512xf32>
    %1 = vector.shape_cast %0 : vector<1x9x512xf32> to vector<9x512xf32>
    %c0_2 = arith.constant 0 : index
    %c0_3 = arith.constant 0 : index
    %2 = vector.load %arg2[%c0_2, %c0_3] : memref<72x9xf32, #tpu.memory_space<vmem>>, vector<72x9xf32>
    %cst = arith.constant dense<0.000000e+00> : vector<72x512xf32>
    %3 = tpu.matmul %2, %1, %cst {dimension_numbers = #tpu.dot_dimension_numbers<[1], [0], [0], [1], [0, 0, 1, 1], [], []>} : vector<72x9xf32>, vector<9x512xf32>, vector<72x512xf32> -> vector<72x512xf32>
    %4 = vector.extract_strided_slice %3 {offsets = [64, 0], sizes = [8, 512], strides = [1, 1]} : vector<72x512xf32> to vector<8x512xf32>
    %5 = vector.extract_strided_slice %3 {offsets = [0, 0], sizes = [8, 512], strides = [1, 1]} : vector<72x512xf32> to vector<8x512xf32>
    %c0_4 = arith.constant 0 : index
    %c0_5 = arith.constant 0 : index
    %c0_6 = arith.constant 0 : index
    %c0_7 = arith.constant 0 : index
    %6 = vector.load %arg6[%c0_4, %c0_5, %c0_6, %c0_7] : memref<1x8x8x512xf32, #tpu.memory_space<vmem>>, vector<1x1x8x512xf32>
    %7 = vector.shape_cast %6 : vector<1x1x8x512xf32> to vector<8x512xf32>
    %8 = vector.shape_cast %5 : vector<8x512xf32> to vector<1x1x8x512xf32>
    tpu.vector_store %arg6[%c0_4, %c0_5, %c0_6, %c0_7], %8 {strides = array<i32>} : memref<1x8x8x512xf32, #tpu.memory_space<vmem>>, vector<1x1x8x512xf32>,
    %9 = vector.extract_strided_slice %3 {offsets = [8, 0], sizes = [8, 512], strides = [1, 1]} : vector<72x512xf32> to vector<8x512xf32>
    %c0_8 = arith.constant 0 : index
    %c1 = arith.constant 1 : index
    %c0_9 = arith.constant 0 : index
    %c0_10 = arith.constant 0 : index
    %10 = vector.load %arg6[%c0_8, %c1, %c0_9, %c0_10] : memref<1x8x8x512xf32, #tpu.memory_space<vmem>>, vector<1x1x8x512xf32>
    %11 = vector.shape_cast %10 : vector<1x1x8x512xf32> to vector<8x512xf32>
    %12 = vector.shape_cast %9 : vector<8x512xf32> to vector<1x1x8x512xf32>
    tpu.vector_store %arg6[%c0_8, %c1, %c0_9, %c0_10], %12 {strides = array<i32>} : memref<1x8x8x512xf32, #tpu.memory_space<vmem>>, vector<1x1x8x512xf32>,
    %13 = vector.extract_strided_slice %3 {offsets = [16, 0], sizes = [8, 512], strides = [1, 1]} : vector<72x512xf32> to vector<8x512xf32>
    %c0_11 = arith.constant 0 : index
    %c2 = arith.constant 2 : index
    %c0_12 = arith.constant 0 : index
    %c0_13 = arith.constant 0 : index
    %14 = vector.load %arg6[%c0_11, %c2, %c0_12, %c0_13] : memref<1x8x8x512xf32, #tpu.memory_space<vmem>>, vector<1x1x8x512xf32>
    %15 = vector.shape_cast %14 : vector<1x1x8x512xf32> to vector<8x512xf32>
    %16 = vector.shape_cast %13 : vector<8x512xf32> to vector<1x1x8x512xf32>
    tpu.vector_store %arg6[%c0_11, %c2, %c0_12, %c0_13], %16 {strides = array<i32>} : memref<1x8x8x512xf32, #tpu.memory_space<vmem>>, vector<1x1x8x512xf32>,
    %17 = vector.extract_strided_slice %3 {offsets = [24, 0], sizes = [8, 512], strides = [1, 1]} : vector<72x512xf32> to vector<8x512xf32>
    %c0_14 = arith.constant 0 : index
    %c3 = arith.constant 3 : index
    %c0_15 = arith.constant 0 : index
    %c0_16 = arith.constant 0 : index
    %18 = vector.load %arg6[%c0_14, %c3, %c0_15, %c0_16] : memref<1x8x8x512xf32, #tpu.memory_space<vmem>>, vector<1x1x8x512xf32>
    %19 = vector.shape_cast %18 : vector<1x1x8x512xf32> to vector<8x512xf32>
    %20 = vector.shape_cast %17 : vector<8x512xf32> to vector<1x1x8x512xf32>
    tpu.vector_store %arg6[%c0_14, %c3, %c0_15, %c0_16], %20 {strides = array<i32>} : memref<1x8x8x512xf32, #tpu.memory_space<vmem>>, vector<1x1x8x512xf32>,
    %21 = vector.extract_strided_slice %3 {offsets = [32, 0], sizes = [8, 512], strides = [1, 1]} : vector<72x512xf32> to vector<8x512xf32>
    %c0_17 = arith.constant 0 : index
    %c4 = arith.constant 4 : index
    %c0_18 = arith.constant 0 : index
    %c0_19 = arith.constant 0 : index
    %22 = vector.load %arg6[%c0_17, %c4, %c0_18, %c0_19] : memref<1x8x8x512xf32, #tpu.memory_space<vmem>>, vector<1x1x8x512xf32>
    %23 = vector.shape_cast %22 : vector<1x1x8x512xf32> to vector<8x512xf32>
    %24 = vector.shape_cast %21 : vector<8x512xf32> to vector<1x1x8x512xf32>
    tpu.vector_store %arg6[%c0_17, %c4, %c0_18, %c0_19], %24 {strides = array<i32>} : memref<1x8x8x512xf32, #tpu.memory_space<vmem>>, vector<1x1x8x512xf32>,
    %25 = vector.extract_strided_slice %3 {offsets = [40, 0], sizes = [8, 512], strides = [1, 1]} : vector<72x512xf32> to vector<8x512xf32>
    %c0_20 = arith.constant 0 : index
    %c5 = arith.constant 5 : index
    %c0_21 = arith.constant 0 : index
    %c0_22 = arith.constant 0 : index
    %26 = vector.load %arg6[%c0_20, %c5, %c0_21, %c0_22] : memref<1x8x8x512xf32, #tpu.memory_space<vmem>>, vector<1x1x8x512xf32>
    %27 = vector.shape_cast %26 : vector<1x1x8x512xf32> to vector<8x512xf32>
    %28 = vector.shape_cast %25 : vector<8x512xf32> to vector<1x1x8x512xf32>
    tpu.vector_store %arg6[%c0_20, %c5, %c0_21, %c0_22], %28 {strides = array<i32>} : memref<1x8x8x512xf32, #tpu.memory_space<vmem>>, vector<1x1x8x512xf32>,
    %29 = vector.extract_strided_slice %3 {offsets = [48, 0], sizes = [8, 512], strides = [1, 1]} : vector<72x512xf32> to vector<8x512xf32>
    %c0_23 = arith.constant 0 : index
    %c6 = arith.constant 6 : index
    %c0_24 = arith.constant 0 : index
    %c0_25 = arith.constant 0 : index
    %30 = vector.load %arg6[%c0_23, %c6, %c0_24, %c0_25] : memref<1x8x8x512xf32, #tpu.memory_space<vmem>>, vector<1x1x8x512xf32>
    %31 = vector.shape_cast %30 : vector<1x1x8x512xf32> to vector<8x512xf32>
    %32 = vector.shape_cast %29 : vector<8x512xf32> to vector<1x1x8x512xf32>
    tpu.vector_store %arg6[%c0_23, %c6, %c0_24, %c0_25], %32 {strides = array<i32>} : memref<1x8x8x512xf32, #tpu.memory_space<vmem>>, vector<1x1x8x512xf32>,
    %33 = vector.extract_strided_slice %3 {offsets = [56, 0], sizes = [8, 512], strides = [1, 1]} : vector<72x512xf32> to vector<8x512xf32>
    %c0_26 = arith.constant 0 : index
    %c7 = arith.constant 7 : index
    %c0_27 = arith.constant 0 : index
    %c0_28 = arith.constant 0 : index
    %34 = vector.load %arg6[%c0_26, %c7, %c0_27, %c0_28] : memref<1x8x8x512xf32, #tpu.memory_space<vmem>>, vector<1x1x8x512xf32>
    %35 = vector.shape_cast %34 : vector<1x1x8x512xf32> to vector<8x512xf32>
    %36 = vector.shape_cast %33 : vector<8x512xf32> to vector<1x1x8x512xf32>
    tpu.vector_store %arg6[%c0_26, %c7, %c0_27, %c0_28], %36 {strides = array<i32>} : memref<1x8x8x512xf32, #tpu.memory_space<vmem>>, vector<1x1x8x512xf32>,
    %c1_i32 = arith.constant 1 : i32
    %37 = tpu.dynamic_rotate %4 by %c1_i32 dim 1 : vector<8x512xf32>, i32 -> vector<8x512xf32>
    %c0_29 = arith.constant 0 : index
    %c0_30 = arith.constant 0 : index
    %38 = vector.load %arg3[%c0_29, %c0_30] : memref<6x512xf32, #tpu.memory_space<vmem>>, vector<1x512xf32>
    %39 = arith.subf %37, %4 : vector<8x512xf32>
    %40 = vector.broadcast %38 : vector<1x512xf32> to vector<8x512xf32>
    %41 = arith.mulf %40, %39 : vector<8x512xf32>
    %42 = arith.addf %4, %41 : vector<8x512xf32>
    %c511_i32 = arith.constant 511 : i32
    %43 = tpu.dynamic_rotate %4 by %c511_i32 dim 1 : vector<8x512xf32>, i32 -> vector<8x512xf32>
    %c1_31 = arith.constant 1 : index
    %c0_32 = arith.constant 0 : index
    %44 = vector.load %arg3[%c1_31, %c0_32] : memref<6x512xf32, #tpu.memory_space<vmem>>, vector<1x512xf32>
    %45 = arith.subf %43, %4 : vector<8x512xf32>
    %46 = vector.broadcast %44 : vector<1x512xf32> to vector<8x512xf32>
    %47 = arith.mulf %46, %45 : vector<8x512xf32>
    %48 = arith.addf %4, %47 : vector<8x512xf32>
    %c8_i32 = arith.constant 8 : i32
    %49 = tpu.dynamic_rotate %42 by %c8_i32 dim 1 : vector<8x512xf32>, i32 -> vector<8x512xf32>
    %c2_33 = arith.constant 2 : index
    %c0_34 = arith.constant 0 : index
    %50 = vector.load %arg3[%c2_33, %c0_34] : memref<6x512xf32, #tpu.memory_space<vmem>>, vector<1x512xf32>
    %51 = arith.subf %49, %42 : vector<8x512xf32>
    %52 = vector.broadcast %50 : vector<1x512xf32> to vector<8x512xf32>
    %53 = arith.mulf %52, %51 : vector<8x512xf32>
    %54 = arith.addf %42, %53 : vector<8x512xf32>
    %c504_i32 = arith.constant 504 : i32
    %55 = tpu.dynamic_rotate %42 by %c504_i32 dim 1 : vector<8x512xf32>, i32 -> vector<8x512xf32>
    %c3_35 = arith.constant 3 : index
    %c0_36 = arith.constant 0 : index
    %56 = vector.load %arg3[%c3_35, %c0_36] : memref<6x512xf32, #tpu.memory_space<vmem>>, vector<1x512xf32>
    %57 = arith.subf %55, %42 : vector<8x512xf32>
    %58 = vector.broadcast %56 : vector<1x512xf32> to vector<8x512xf32>
    %59 = arith.mulf %58, %57 : vector<8x512xf32>
    %60 = arith.addf %42, %59 : vector<8x512xf32>
    %c8_i32_37 = arith.constant 8 : i32
    %61 = tpu.dynamic_rotate %48 by %c8_i32_37 dim 1 : vector<8x512xf32>, i32 -> vector<8x512xf32>
    %c2_38 = arith.constant 2 : index
    %c0_39 = arith.constant 0 : index
    %62 = vector.load %arg3[%c2_38, %c0_39] : memref<6x512xf32, #tpu.memory_space<vmem>>, vector<1x512xf32>
    %63 = arith.subf %61, %48 : vector<8x512xf32>
    %64 = vector.broadcast %62 : vector<1x512xf32> to vector<8x512xf32>
    %65 = arith.mulf %64, %63 : vector<8x512xf32>
    %66 = arith.addf %48, %65 : vector<8x512xf32>
    %c504_i32_40 = arith.constant 504 : i32
    %67 = tpu.dynamic_rotate %48 by %c504_i32_40 dim 1 : vector<8x512xf32>, i32 -> vector<8x512xf32>
    %c3_41 = arith.constant 3 : index
    %c0_42 = arith.constant 0 : index
    %68 = vector.load %arg3[%c3_41, %c0_42] : memref<6x512xf32, #tpu.memory_space<vmem>>, vector<1x512xf32>
    %69 = arith.subf %67, %48 : vector<8x512xf32>
    %70 = vector.broadcast %68 : vector<1x512xf32> to vector<8x512xf32>
    %71 = arith.mulf %70, %69 : vector<8x512xf32>
    %72 = arith.addf %48, %71 : vector<8x512xf32>
    %cst_43 = arith.constant 0.000000e+00 : f32
    %73 = vector.broadcast %cst_43 : f32 to vector<8x512xf32>
    %cst_44 = arith.constant 0.000000e+00 : f32
    %74 = vector.broadcast %cst_44 : f32 to vector<8x512xf32>
    %c0_45 = arith.constant 0 : index
    %c0_46 = arith.constant 0 : index
    %c0_47 = arith.constant 0 : index
    %c0_48 = arith.constant 0 : index
    %75 = vector.load %arg6[%c0_45, %c0_46, %c0_47, %c0_48] : memref<1x8x8x512xf32, #tpu.memory_space<vmem>>, vector<1x1x8x512xf32>
    %76 = vector.shape_cast %75 : vector<1x1x8x512xf32> to vector<8x512xf32>
    %c64_i32 = arith.constant 64 : i32
    %77 = tpu.dynamic_rotate %54 by %c64_i32 dim 1 : vector<8x512xf32>, i32 -> vector<8x512xf32>
    %c4_49 = arith.constant 4 : index
    %c0_50 = arith.constant 0 : index
    %78 = vector.load %arg3[%c4_49, %c0_50] : memref<6x512xf32, #tpu.memory_space<vmem>>, vector<1x512xf32>
    %79 = arith.subf %77, %54 : vector<8x512xf32>
    %80 = vector.broadcast %78 : vector<1x512xf32> to vector<8x512xf32>
    %81 = arith.mulf %80, %79 : vector<8x512xf32>
    %82 = arith.addf %54, %81 : vector<8x512xf32>
    %83 = arith.addf %76, %82 : vector<8x512xf32>
    %c0_51 = arith.constant 0 : index
    %c0_52 = arith.constant 0 : index
    %c0_53 = arith.constant 0 : index
    %c0_54 = arith.constant 0 : index
    %84 = vector.load %arg6[%c0_51, %c0_52, %c0_53, %c0_54] : memref<1x8x8x512xf32, #tpu.memory_space<vmem>>, vector<1x1x8x512xf32>
    %85 = vector.shape_cast %84 : vector<1x1x8x512xf32> to vector<8x512xf32>
    %86 = vector.shape_cast %83 : vector<8x512xf32> to vector<1x1x8x512xf32>
    tpu.vector_store %arg6[%c0_51, %c0_52, %c0_53, %c0_54], %86 {strides = array<i32>} : memref<1x8x8x512xf32, #tpu.memory_space<vmem>>, vector<1x1x8x512xf32>,
    %87 = arith.addf %73, %83 : vector<8x512xf32>
    %88 = arith.mulf %83, %83 : vector<8x512xf32>
    %89 = arith.addf %74, %88 : vector<8x512xf32>
    %c0_55 = arith.constant 0 : index
    %c1_56 = arith.constant 1 : index
    %c0_57 = arith.constant 0 : index
    %c0_58 = arith.constant 0 : index
    %90 = vector.load %arg6[%c0_55, %c1_56, %c0_57, %c0_58] : memref<1x8x8x512xf32, #tpu.memory_space<vmem>>, vector<1x1x8x512xf32>
    %91 = vector.shape_cast %90 : vector<1x1x8x512xf32> to vector<8x512xf32>
    %c64_i32_59 = arith.constant 64 : i32
    %92 = tpu.dynamic_rotate %66 by %c64_i32_59 dim 1 : vector<8x512xf32>, i32 -> vector<8x512xf32>
    %c4_60 = arith.constant 4 : index
    %c0_61 = arith.constant 0 : index
    %93 = vector.load %arg3[%c4_60, %c0_61] : memref<6x512xf32, #tpu.memory_space<vmem>>, vector<1x512xf32>
    %94 = arith.subf %92, %66 : vector<8x512xf32>
    %95 = vector.broadcast %93 : vector<1x512xf32> to vector<8x512xf32>
    %96 = arith.mulf %95, %94 : vector<8x512xf32>
    %97 = arith.addf %66, %96 : vector<8x512xf32>
    %98 = arith.addf %91, %97 : vector<8x512xf32>
    %c0_62 = arith.constant 0 : index
    %c1_63 = arith.constant 1 : index
    %c0_64 = arith.constant 0 : index
    %c0_65 = arith.constant 0 : index
    %99 = vector.load %arg6[%c0_62, %c1_63, %c0_64, %c0_65] : memref<1x8x8x512xf32, #tpu.memory_space<vmem>>, vector<1x1x8x512xf32>
    %100 = vector.shape_cast %99 : vector<1x1x8x512xf32> to vector<8x512xf32>
    %101 = vector.shape_cast %98 : vector<8x512xf32> to vector<1x1x8x512xf32>
    tpu.vector_store %arg6[%c0_62, %c1_63, %c0_64, %c0_65], %101 {strides = array<i32>} : memref<1x8x8x512xf32, #tpu.memory_space<vmem>>, vector<1x1x8x512xf32>,
    %102 = arith.addf %87, %98 : vector<8x512xf32>
    %103 = arith.mulf %98, %98 : vector<8x512xf32>
    %104 = arith.addf %89, %103 : vector<8x512xf32>
    %c0_66 = arith.constant 0 : index
    %c2_67 = arith.constant 2 : index
    %c0_68 = arith.constant 0 : index
    %c0_69 = arith.constant 0 : index
    %105 = vector.load %arg6[%c0_66, %c2_67, %c0_68, %c0_69] : memref<1x8x8x512xf32, #tpu.memory_space<vmem>>, vector<1x1x8x512xf32>
    %106 = vector.shape_cast %105 : vector<1x1x8x512xf32> to vector<8x512xf32>
    %c64_i32_70 = arith.constant 64 : i32
    %107 = tpu.dynamic_rotate %60 by %c64_i32_70 dim 1 : vector<8x512xf32>, i32 -> vector<8x512xf32>
    %c4_71 = arith.constant 4 : index
    %c0_72 = arith.constant 0 : index
    %108 = vector.load %arg3[%c4_71, %c0_72] : memref<6x512xf32, #tpu.memory_space<vmem>>, vector<1x512xf32>
    %109 = arith.subf %107, %60 : vector<8x512xf32>
    %110 = vector.broadcast %108 : vector<1x512xf32> to vector<8x512xf32>
    %111 = arith.mulf %110, %109 : vector<8x512xf32>
    %112 = arith.addf %60, %111 : vector<8x512xf32>
    %113 = arith.addf %106, %112 : vector<8x512xf32>
    %c0_73 = arith.constant 0 : index
    %c2_74 = arith.constant 2 : index
    %c0_75 = arith.constant 0 : index
    %c0_76 = arith.constant 0 : index
    %114 = vector.load %arg6[%c0_73, %c2_74, %c0_75, %c0_76] : memref<1x8x8x512xf32, #tpu.memory_space<vmem>>, vector<1x1x8x512xf32>
    %115 = vector.shape_cast %114 : vector<1x1x8x512xf32> to vector<8x512xf32>
    %116 = vector.shape_cast %113 : vector<8x512xf32> to vector<1x1x8x512xf32>
    tpu.vector_store %arg6[%c0_73, %c2_74, %c0_75, %c0_76], %116 {strides = array<i32>} : memref<1x8x8x512xf32, #tpu.memory_space<vmem>>, vector<1x1x8x512xf32>,
    %117 = arith.addf %102, %113 : vector<8x512xf32>
    %118 = arith.mulf %113, %113 : vector<8x512xf32>
    %119 = arith.addf %104, %118 : vector<8x512xf32>
    %c0_77 = arith.constant 0 : index
    %c3_78 = arith.constant 3 : index
    %c0_79 = arith.constant 0 : index
    %c0_80 = arith.constant 0 : index
    %120 = vector.load %arg6[%c0_77, %c3_78, %c0_79, %c0_80] : memref<1x8x8x512xf32, #tpu.memory_space<vmem>>, vector<1x1x8x512xf32>
    %121 = vector.shape_cast %120 : vector<1x1x8x512xf32> to vector<8x512xf32>
    %c64_i32_81 = arith.constant 64 : i32
    %122 = tpu.dynamic_rotate %72 by %c64_i32_81 dim 1 : vector<8x512xf32>, i32 -> vector<8x512xf32>
    %c4_82 = arith.constant 4 : index
    %c0_83 = arith.constant 0 : index
    %123 = vector.load %arg3[%c4_82, %c0_83] : memref<6x512xf32, #tpu.memory_space<vmem>>, vector<1x512xf32>
    %124 = arith.subf %122, %72 : vector<8x512xf32>
    %125 = vector.broadcast %123 : vector<1x512xf32> to vector<8x512xf32>
    %126 = arith.mulf %125, %124 : vector<8x512xf32>
    %127 = arith.addf %72, %126 : vector<8x512xf32>
    %128 = arith.addf %121, %127 : vector<8x512xf32>
    %c0_84 = arith.constant 0 : index
    %c3_85 = arith.constant 3 : index
    %c0_86 = arith.constant 0 : index
    %c0_87 = arith.constant 0 : index
    %129 = vector.load %arg6[%c0_84, %c3_85, %c0_86, %c0_87] : memref<1x8x8x512xf32, #tpu.memory_space<vmem>>, vector<1x1x8x512xf32>
    %130 = vector.shape_cast %129 : vector<1x1x8x512xf32> to vector<8x512xf32>
    %131 = vector.shape_cast %128 : vector<8x512xf32> to vector<1x1x8x512xf32>
    tpu.vector_store %arg6[%c0_84, %c3_85, %c0_86, %c0_87], %131 {strides = array<i32>} : memref<1x8x8x512xf32, #tpu.memory_space<vmem>>, vector<1x1x8x512xf32>,
    %132 = arith.addf %117, %128 : vector<8x512xf32>
    %133 = arith.mulf %128, %128 : vector<8x512xf32>
    %134 = arith.addf %119, %133 : vector<8x512xf32>
    %c0_88 = arith.constant 0 : index
    %c4_89 = arith.constant 4 : index
    %c0_90 = arith.constant 0 : index
    %c0_91 = arith.constant 0 : index
    %135 = vector.load %arg6[%c0_88, %c4_89, %c0_90, %c0_91] : memref<1x8x8x512xf32, #tpu.memory_space<vmem>>, vector<1x1x8x512xf32>
    %136 = vector.shape_cast %135 : vector<1x1x8x512xf32> to vector<8x512xf32>
    %c448_i32 = arith.constant 448 : i32
    %137 = tpu.dynamic_rotate %54 by %c448_i32 dim 1 : vector<8x512xf32>, i32 -> vector<8x512xf32>
    %c5_92 = arith.constant 5 : index
    %c0_93 = arith.constant 0 : index
    %138 = vector.load %arg3[%c5_92, %c0_93] : memref<6x512xf32, #tpu.memory_space<vmem>>, vector<1x512xf32>
    %139 = arith.subf %137, %54 : vector<8x512xf32>
    %140 = vector.broadcast %138 : vector<1x512xf32> to vector<8x512xf32>
    %141 = arith.mulf %140, %139 : vector<8x512xf32>
    %142 = arith.addf %54, %141 : vector<8x512xf32>
    %143 = arith.addf %136, %142 : vector<8x512xf32>
    %c0_94 = arith.constant 0 : index
    %c4_95 = arith.constant 4 : index
    %c0_96 = arith.constant 0 : index
    %c0_97 = arith.constant 0 : index
    %144 = vector.load %arg6[%c0_94, %c4_95, %c0_96, %c0_97] : memref<1x8x8x512xf32, #tpu.memory_space<vmem>>, vector<1x1x8x512xf32>
    %145 = vector.shape_cast %144 : vector<1x1x8x512xf32> to vector<8x512xf32>
    %146 = vector.shape_cast %143 : vector<8x512xf32> to vector<1x1x8x512xf32>
    tpu.vector_store %arg6[%c0_94, %c4_95, %c0_96, %c0_97], %146 {strides = array<i32>} : memref<1x8x8x512xf32, #tpu.memory_space<vmem>>, vector<1x1x8x512xf32>,
    %147 = arith.addf %132, %143 : vector<8x512xf32>
    %148 = arith.mulf %143, %143 : vector<8x512xf32>
    %149 = arith.addf %134, %148 : vector<8x512xf32>
    %c0_98 = arith.constant 0 : index
    %c5_99 = arith.constant 5 : index
    %c0_100 = arith.constant 0 : index
    %c0_101 = arith.constant 0 : index
    %150 = vector.load %arg6[%c0_98, %c5_99, %c0_100, %c0_101] : memref<1x8x8x512xf32, #tpu.memory_space<vmem>>, vector<1x1x8x512xf32>
    %151 = vector.shape_cast %150 : vector<1x1x8x512xf32> to vector<8x512xf32>
    %c448_i32_102 = arith.constant 448 : i32
    %152 = tpu.dynamic_rotate %66 by %c448_i32_102 dim 1 : vector<8x512xf32>, i32 -> vector<8x512xf32>
    %c5_103 = arith.constant 5 : index
    %c0_104 = arith.constant 0 : index
    %153 = vector.load %arg3[%c5_103, %c0_104] : memref<6x512xf32, #tpu.memory_space<vmem>>, vector<1x512xf32>
    %154 = arith.subf %152, %66 : vector<8x512xf32>
    %155 = vector.broadcast %153 : vector<1x512xf32> to vector<8x512xf32>
    %156 = arith.mulf %155, %154 : vector<8x512xf32>
    %157 = arith.addf %66, %156 : vector<8x512xf32>
    %158 = arith.addf %151, %157 : vector<8x512xf32>
    %c0_105 = arith.constant 0 : index
    %c5_106 = arith.constant 5 : index
    %c0_107 = arith.constant 0 : index
    %c0_108 = arith.constant 0 : index
    %159 = vector.load %arg6[%c0_105, %c5_106, %c0_107, %c0_108] : memref<1x8x8x512xf32, #tpu.memory_space<vmem>>, vector<1x1x8x512xf32>
    %160 = vector.shape_cast %159 : vector<1x1x8x512xf32> to vector<8x512xf32>
    %161 = vector.shape_cast %158 : vector<8x512xf32> to vector<1x1x8x512xf32>
    tpu.vector_store %arg6[%c0_105, %c5_106, %c0_107, %c0_108], %161 {strides = array<i32>} : memref<1x8x8x512xf32, #tpu.memory_space<vmem>>, vector<1x1x8x512xf32>,
    %162 = arith.addf %147, %158 : vector<8x512xf32>
    %163 = arith.mulf %158, %158 : vector<8x512xf32>
    %164 = arith.addf %149, %163 : vector<8x512xf32>
    %c0_109 = arith.constant 0 : index
    %c6_110 = arith.constant 6 : index
    %c0_111 = arith.constant 0 : index
    %c0_112 = arith.constant 0 : index
    %165 = vector.load %arg6[%c0_109, %c6_110, %c0_111, %c0_112] : memref<1x8x8x512xf32, #tpu.memory_space<vmem>>, vector<1x1x8x512xf32>
    %166 = vector.shape_cast %165 : vector<1x1x8x512xf32> to vector<8x512xf32>
    %c448_i32_113 = arith.constant 448 : i32
    %167 = tpu.dynamic_rotate %60 by %c448_i32_113 dim 1 : vector<8x512xf32>, i32 -> vector<8x512xf32>
    %c5_114 = arith.constant 5 : index
    %c0_115 = arith.constant 0 : index
    %168 = vector.load %arg3[%c5_114, %c0_115] : memref<6x512xf32, #tpu.memory_space<vmem>>, vector<1x512xf32>
    %169 = arith.subf %167, %60 : vector<8x512xf32>
    %170 = vector.broadcast %168 : vector<1x512xf32> to vector<8x512xf32>
    %171 = arith.mulf %170, %169 : vector<8x512xf32>
    %172 = arith.addf %60, %171 : vector<8x512xf32>
    %173 = arith.addf %166, %172 : vector<8x512xf32>
    %c0_116 = arith.constant 0 : index
    %c6_117 = arith.constant 6 : index
    %c0_118 = arith.constant 0 : index
    %c0_119 = arith.constant 0 : index
    %174 = vector.load %arg6[%c0_116, %c6_117, %c0_118, %c0_119] : memref<1x8x8x512xf32, #tpu.memory_space<vmem>>, vector<1x1x8x512xf32>
    %175 = vector.shape_cast %174 : vector<1x1x8x512xf32> to vector<8x512xf32>
    %176 = vector.shape_cast %173 : vector<8x512xf32> to vector<1x1x8x512xf32>
    tpu.vector_store %arg6[%c0_116, %c6_117, %c0_118, %c0_119], %176 {strides = array<i32>} : memref<1x8x8x512xf32, #tpu.memory_space<vmem>>, vector<1x1x8x512xf32>,
    %177 = arith.addf %162, %173 : vector<8x512xf32>
    %178 = arith.mulf %173, %173 : vector<8x512xf32>
    %179 = arith.addf %164, %178 : vector<8x512xf32>
    %c0_120 = arith.constant 0 : index
    %c7_121 = arith.constant 7 : index
    %c0_122 = arith.constant 0 : index
    %c0_123 = arith.constant 0 : index
    %180 = vector.load %arg6[%c0_120, %c7_121, %c0_122, %c0_123] : memref<1x8x8x512xf32, #tpu.memory_space<vmem>>, vector<1x1x8x512xf32>
    %181 = vector.shape_cast %180 : vector<1x1x8x512xf32> to vector<8x512xf32>
    %c448_i32_124 = arith.constant 448 : i32
    %182 = tpu.dynamic_rotate %72 by %c448_i32_124 dim 1 : vector<8x512xf32>, i32 -> vector<8x512xf32>
    %c5_125 = arith.constant 5 : index
    %c0_126 = arith.constant 0 : index
    %183 = vector.load %arg3[%c5_125, %c0_126] : memref<6x512xf32, #tpu.memory_space<vmem>>, vector<1x512xf32>
    %184 = arith.subf %182, %72 : vector<8x512xf32>
    %185 = vector.broadcast %183 : vector<1x512xf32> to vector<8x512xf32>
    %186 = arith.mulf %185, %184 : vector<8x512xf32>
    %187 = arith.addf %72, %186 : vector<8x512xf32>
    %188 = arith.addf %181, %187 : vector<8x512xf32>
    %c0_127 = arith.constant 0 : index
    %c7_128 = arith.constant 7 : index
    %c0_129 = arith.constant 0 : index
    %c0_130 = arith.constant 0 : index
    %189 = vector.load %arg6[%c0_127, %c7_128, %c0_129, %c0_130] : memref<1x8x8x512xf32, #tpu.memory_space<vmem>>, vector<1x1x8x512xf32>
    %190 = vector.shape_cast %189 : vector<1x1x8x512xf32> to vector<8x512xf32>
    %191 = vector.shape_cast %188 : vector<8x512xf32> to vector<1x1x8x512xf32>
    tpu.vector_store %arg6[%c0_127, %c7_128, %c0_129, %c0_130], %191 {strides = array<i32>} : memref<1x8x8x512xf32, #tpu.memory_space<vmem>>, vector<1x1x8x512xf32>,
    %192 = arith.addf %177, %188 : vector<8x512xf32>
    %193 = arith.mulf %188, %188 : vector<8x512xf32>
    %194 = arith.addf %179, %193 : vector<8x512xf32>
    %195 = vector.shape_cast %192 : vector<8x512xf32> to vector<1x8x512xf32>
    %cst_131 = arith.constant dense<0.000000e+00> : vector<1xf32>
    %196 = vector.multi_reduction <add>, %195, %cst_131 [1, 2] : vector<1x8x512xf32> to vector<1xf32>
    %197 = vector.shape_cast %196 : vector<1xf32> to vector<1x1x1xf32>
    %198 = vector.extract %197[0, 0, 0] : f32 from vector<1x1x1xf32>
    %cst_132 = arith.constant 3.05175781E-5 : f32
    %199 = arith.mulf %198, %cst_132 : f32
    %200 = vector.shape_cast %194 : vector<8x512xf32> to vector<1x8x512xf32>
    %cst_133 = arith.constant dense<0.000000e+00> : vector<1xf32>
    %201 = vector.multi_reduction <add>, %200, %cst_133 [1, 2] : vector<1x8x512xf32> to vector<1xf32>
    %202 = vector.shape_cast %201 : vector<1xf32> to vector<1x1x1xf32>
    %203 = vector.extract %202[0, 0, 0] : f32 from vector<1x1x1xf32>
    %cst_134 = arith.constant 3.05175781E-5 : f32
    %204 = arith.mulf %203, %cst_134 : f32
    %205 = arith.mulf %199, %199 : f32
    %206 = arith.subf %204, %205 : f32
    %cst_135 = arith.constant 9.99999974E-6 : f32
    %207 = arith.addf %206, %cst_135 : f32
    %208 = math.rsqrt %207 : f32
    %c0_136 = arith.constant 0 : index
    %c0_137 = arith.constant 0 : index
    %209 = vector.load %arg4[%c0_136, %c0_137] : memref<8x1xf32, #tpu.memory_space<vmem>>, vector<8x1xf32>
    %210 = vector.broadcast %208 : f32 to vector<8x1xf32>
    %211 = arith.mulf %209, %210 : vector<8x1xf32>
    %c0_138 = arith.constant 0 : index
    %c0_139 = arith.constant 0 : index
    %212 = vector.load %arg5[%c0_138, %c0_139] : memref<8x1xf32, #tpu.memory_space<vmem>>, vector<8x1xf32>
    %213 = vector.broadcast %199 : f32 to vector<8x1xf32>
    %214 = arith.mulf %213, %211 : vector<8x1xf32>
    %215 = arith.subf %212, %214 : vector<8x1xf32>
    %216 = vector.shape_cast %211 : vector<8x1xf32> to vector<8x1xf32>
    %217 = vector.broadcast %216 : vector<8x1xf32> to vector<8x512xf32>
    %218 = vector.shape_cast %215 : vector<8x1xf32> to vector<8x1xf32>
    %219 = vector.broadcast %218 : vector<8x1xf32> to vector<8x512xf32>
    %c0_140 = arith.constant 0 : index
    %c0_141 = arith.constant 0 : index
    %c0_142 = arith.constant 0 : index
    %c0_143 = arith.constant 0 : index
    %220 = vector.load %arg6[%c0_140, %c0_141, %c0_142, %c0_143] : memref<1x8x8x512xf32, #tpu.memory_space<vmem>>, vector<1x1x8x512xf32>
    %221 = vector.shape_cast %220 : vector<1x1x8x512xf32> to vector<8x512xf32>
    %222 = arith.mulf %221, %217 : vector<8x512xf32>
    %223 = arith.addf %222, %219 : vector<8x512xf32>
    %cst_144 = arith.constant 0.000000e+00 : f32
    %cst_145 = arith.constant 6.000000e+00 : f32
    %224 = vector.broadcast %cst_144 : f32 to vector<8x512xf32>
    %225 = arith.maximumf %224, %223 : vector<8x512xf32>
    %226 = vector.broadcast %cst_145 : f32 to vector<8x512xf32>
    %227 = arith.minimumf %226, %225 : vector<8x512xf32>
    %c0_146 = arith.constant 0 : index
    %c0_147 = arith.constant 0 : index
    %c0_148 = arith.constant 0 : index
    %c0_149 = arith.constant 0 : index
    %228 = vector.load %arg6[%c0_146, %c0_147, %c0_148, %c0_149] : memref<1x8x8x512xf32, #tpu.memory_space<vmem>>, vector<1x1x8x512xf32>
    %229 = vector.shape_cast %228 : vector<1x1x8x512xf32> to vector<8x512xf32>
    %230 = vector.shape_cast %227 : vector<8x512xf32> to vector<1x1x8x512xf32>
    tpu.vector_store %arg6[%c0_146, %c0_147, %c0_148, %c0_149], %230 {strides = array<i32>} : memref<1x8x8x512xf32, #tpu.memory_space<vmem>>, vector<1x1x8x512xf32>,
    %c0_150 = arith.constant 0 : index
    %c1_151 = arith.constant 1 : index
    %c0_152 = arith.constant 0 : index
    %c0_153 = arith.constant 0 : index
    %231 = vector.load %arg6[%c0_150, %c1_151, %c0_152, %c0_153] : memref<1x8x8x512xf32, #tpu.memory_space<vmem>>, vector<1x1x8x512xf32>
    %232 = vector.shape_cast %231 : vector<1x1x8x512xf32> to vector<8x512xf32>
    %233 = arith.mulf %232, %217 : vector<8x512xf32>
    %234 = arith.addf %233, %219 : vector<8x512xf32>
    %cst_154 = arith.constant 0.000000e+00 : f32
    %cst_155 = arith.constant 6.000000e+00 : f32
    %235 = vector.broadcast %cst_154 : f32 to vector<8x512xf32>
    %236 = arith.maximumf %235, %234 : vector<8x512xf32>
    %237 = vector.broadcast %cst_155 : f32 to vector<8x512xf32>
    %238 = arith.minimumf %237, %236 : vector<8x512xf32>
    %c0_156 = arith.constant 0 : index
    %c1_157 = arith.constant 1 : index
    %c0_158 = arith.constant 0 : index
    %c0_159 = arith.constant 0 : index
    %239 = vector.load %arg6[%c0_156, %c1_157, %c0_158, %c0_159] : memref<1x8x8x512xf32, #tpu.memory_space<vmem>>, vector<1x1x8x512xf32>
    %240 = vector.shape_cast %239 : vector<1x1x8x512xf32> to vector<8x512xf32>
    %241 = vector.shape_cast %238 : vector<8x512xf32> to vector<1x1x8x512xf32>
    tpu.vector_store %arg6[%c0_156, %c1_157, %c0_158, %c0_159], %241 {strides = array<i32>} : memref<1x8x8x512xf32, #tpu.memory_space<vmem>>, vector<1x1x8x512xf32>,
    %c0_160 = arith.constant 0 : index
    %c2_161 = arith.constant 2 : index
    %c0_162 = arith.constant 0 : index
    %c0_163 = arith.constant 0 : index
    %242 = vector.load %arg6[%c0_160, %c2_161, %c0_162, %c0_163] : memref<1x8x8x512xf32, #tpu.memory_space<vmem>>, vector<1x1x8x512xf32>
    %243 = vector.shape_cast %242 : vector<1x1x8x512xf32> to vector<8x512xf32>
    %244 = arith.mulf %243, %217 : vector<8x512xf32>
    %245 = arith.addf %244, %219 : vector<8x512xf32>
    %cst_164 = arith.constant 0.000000e+00 : f32
    %cst_165 = arith.constant 6.000000e+00 : f32
    %246 = vector.broadcast %cst_164 : f32 to vector<8x512xf32>
    %247 = arith.maximumf %246, %245 : vector<8x512xf32>
    %248 = vector.broadcast %cst_165 : f32 to vector<8x512xf32>
    %249 = arith.minimumf %248, %247 : vector<8x512xf32>
    %c0_166 = arith.constant 0 : index
    %c2_167 = arith.constant 2 : index
    %c0_168 = arith.constant 0 : index
    %c0_169 = arith.constant 0 : index
    %250 = vector.load %arg6[%c0_166, %c2_167, %c0_168, %c0_169] : memref<1x8x8x512xf32, #tpu.memory_space<vmem>>, vector<1x1x8x512xf32>
    %251 = vector.shape_cast %250 : vector<1x1x8x512xf32> to vector<8x512xf32>
    %252 = vector.shape_cast %249 : vector<8x512xf32> to vector<1x1x8x512xf32>
    tpu.vector_store %arg6[%c0_166, %c2_167, %c0_168, %c0_169], %252 {strides = array<i32>} : memref<1x8x8x512xf32, #tpu.memory_space<vmem>>, vector<1x1x8x512xf32>,
    %c0_170 = arith.constant 0 : index
    %c3_171 = arith.constant 3 : index
    %c0_172 = arith.constant 0 : index
    %c0_173 = arith.constant 0 : index
    %253 = vector.load %arg6[%c0_170, %c3_171, %c0_172, %c0_173] : memref<1x8x8x512xf32, #tpu.memory_space<vmem>>, vector<1x1x8x512xf32>
    %254 = vector.shape_cast %253 : vector<1x1x8x512xf32> to vector<8x512xf32>
    %255 = arith.mulf %254, %217 : vector<8x512xf32>
    %256 = arith.addf %255, %219 : vector<8x512xf32>
    %cst_174 = arith.constant 0.000000e+00 : f32
    %cst_175 = arith.constant 6.000000e+00 : f32
    %257 = vector.broadcast %cst_174 : f32 to vector<8x512xf32>
    %258 = arith.maximumf %257, %256 : vector<8x512xf32>
    %259 = vector.broadcast %cst_175 : f32 to vector<8x512xf32>
    %260 = arith.minimumf %259, %258 : vector<8x512xf32>
    %c0_176 = arith.constant 0 : index
    %c3_177 = arith.constant 3 : index
    %c0_178 = arith.constant 0 : index
    %c0_179 = arith.constant 0 : index
    %261 = vector.load %arg6[%c0_176, %c3_177, %c0_178, %c0_179] : memref<1x8x8x512xf32, #tpu.memory_space<vmem>>, vector<1x1x8x512xf32>
    %262 = vector.shape_cast %261 : vector<1x1x8x512xf32> to vector<8x512xf32>
    %263 = vector.shape_cast %260 : vector<8x512xf32> to vector<1x1x8x512xf32>
    tpu.vector_store %arg6[%c0_176, %c3_177, %c0_178, %c0_179], %263 {strides = array<i32>} : memref<1x8x8x512xf32, #tpu.memory_space<vmem>>, vector<1x1x8x512xf32>,
    %c0_180 = arith.constant 0 : index
    %c4_181 = arith.constant 4 : index
    %c0_182 = arith.constant 0 : index
    %c0_183 = arith.constant 0 : index
    %264 = vector.load %arg6[%c0_180, %c4_181, %c0_182, %c0_183] : memref<1x8x8x512xf32, #tpu.memory_space<vmem>>, vector<1x1x8x512xf32>
    %265 = vector.shape_cast %264 : vector<1x1x8x512xf32> to vector<8x512xf32>
    %266 = arith.mulf %265, %217 : vector<8x512xf32>
    %267 = arith.addf %266, %219 : vector<8x512xf32>
    %cst_184 = arith.constant 0.000000e+00 : f32
    %cst_185 = arith.constant 6.000000e+00 : f32
    %268 = vector.broadcast %cst_184 : f32 to vector<8x512xf32>
    %269 = arith.maximumf %268, %267 : vector<8x512xf32>
    %270 = vector.broadcast %cst_185 : f32 to vector<8x512xf32>
    %271 = arith.minimumf %270, %269 : vector<8x512xf32>
    %c0_186 = arith.constant 0 : index
    %c4_187 = arith.constant 4 : index
    %c0_188 = arith.constant 0 : index
    %c0_189 = arith.constant 0 : index
    %272 = vector.load %arg6[%c0_186, %c4_187, %c0_188, %c0_189] : memref<1x8x8x512xf32, #tpu.memory_space<vmem>>, vector<1x1x8x512xf32>
    %273 = vector.shape_cast %272 : vector<1x1x8x512xf32> to vector<8x512xf32>
    %274 = vector.shape_cast %271 : vector<8x512xf32> to vector<1x1x8x512xf32>
    tpu.vector_store %arg6[%c0_186, %c4_187, %c0_188, %c0_189], %274 {strides = array<i32>} : memref<1x8x8x512xf32, #tpu.memory_space<vmem>>, vector<1x1x8x512xf32>,
    %c0_190 = arith.constant 0 : index
    %c5_191 = arith.constant 5 : index
    %c0_192 = arith.constant 0 : index
    %c0_193 = arith.constant 0 : index
    %275 = vector.load %arg6[%c0_190, %c5_191, %c0_192, %c0_193] : memref<1x8x8x512xf32, #tpu.memory_space<vmem>>, vector<1x1x8x512xf32>
    %276 = vector.shape_cast %275 : vector<1x1x8x512xf32> to vector<8x512xf32>
    %277 = arith.mulf %276, %217 : vector<8x512xf32>
    %278 = arith.addf %277, %219 : vector<8x512xf32>
    %cst_194 = arith.constant 0.000000e+00 : f32
    %cst_195 = arith.constant 6.000000e+00 : f32
    %279 = vector.broadcast %cst_194 : f32 to vector<8x512xf32>
    %280 = arith.maximumf %279, %278 : vector<8x512xf32>
    %281 = vector.broadcast %cst_195 : f32 to vector<8x512xf32>
    %282 = arith.minimumf %281, %280 : vector<8x512xf32>
    %c0_196 = arith.constant 0 : index
    %c5_197 = arith.constant 5 : index
    %c0_198 = arith.constant 0 : index
    %c0_199 = arith.constant 0 : index
    %283 = vector.load %arg6[%c0_196, %c5_197, %c0_198, %c0_199] : memref<1x8x8x512xf32, #tpu.memory_space<vmem>>, vector<1x1x8x512xf32>
    %284 = vector.shape_cast %283 : vector<1x1x8x512xf32> to vector<8x512xf32>
    %285 = vector.shape_cast %282 : vector<8x512xf32> to vector<1x1x8x512xf32>
    tpu.vector_store %arg6[%c0_196, %c5_197, %c0_198, %c0_199], %285 {strides = array<i32>} : memref<1x8x8x512xf32, #tpu.memory_space<vmem>>, vector<1x1x8x512xf32>,
    %c0_200 = arith.constant 0 : index
    %c6_201 = arith.constant 6 : index
    %c0_202 = arith.constant 0 : index
    %c0_203 = arith.constant 0 : index
    %286 = vector.load %arg6[%c0_200, %c6_201, %c0_202, %c0_203] : memref<1x8x8x512xf32, #tpu.memory_space<vmem>>, vector<1x1x8x512xf32>
    %287 = vector.shape_cast %286 : vector<1x1x8x512xf32> to vector<8x512xf32>
    %288 = arith.mulf %287, %217 : vector<8x512xf32>
    %289 = arith.addf %288, %219 : vector<8x512xf32>
    %cst_204 = arith.constant 0.000000e+00 : f32
    %cst_205 = arith.constant 6.000000e+00 : f32
    %290 = vector.broadcast %cst_204 : f32 to vector<8x512xf32>
    %291 = arith.maximumf %290, %289 : vector<8x512xf32>
    %292 = vector.broadcast %cst_205 : f32 to vector<8x512xf32>
    %293 = arith.minimumf %292, %291 : vector<8x512xf32>
    %c0_206 = arith.constant 0 : index
    %c6_207 = arith.constant 6 : index
    %c0_208 = arith.constant 0 : index
    %c0_209 = arith.constant 0 : index
    %294 = vector.load %arg6[%c0_206, %c6_207, %c0_208, %c0_209] : memref<1x8x8x512xf32, #tpu.memory_space<vmem>>, vector<1x1x8x512xf32>
    %295 = vector.shape_cast %294 : vector<1x1x8x512xf32> to vector<8x512xf32>
    %296 = vector.shape_cast %293 : vector<8x512xf32> to vector<1x1x8x512xf32>
    tpu.vector_store %arg6[%c0_206, %c6_207, %c0_208, %c0_209], %296 {strides = array<i32>} : memref<1x8x8x512xf32, #tpu.memory_space<vmem>>, vector<1x1x8x512xf32>,
    %c0_210 = arith.constant 0 : index
    %c7_211 = arith.constant 7 : index
    %c0_212 = arith.constant 0 : index
    %c0_213 = arith.constant 0 : index
    %297 = vector.load %arg6[%c0_210, %c7_211, %c0_212, %c0_213] : memref<1x8x8x512xf32, #tpu.memory_space<vmem>>, vector<1x1x8x512xf32>
    %298 = vector.shape_cast %297 : vector<1x1x8x512xf32> to vector<8x512xf32>
    %299 = arith.mulf %298, %217 : vector<8x512xf32>
    %300 = arith.addf %299, %219 : vector<8x512xf32>
    %cst_214 = arith.constant 0.000000e+00 : f32
    %cst_215 = arith.constant 6.000000e+00 : f32
    %301 = vector.broadcast %cst_214 : f32 to vector<8x512xf32>
    %302 = arith.maximumf %301, %300 : vector<8x512xf32>
    %303 = vector.broadcast %cst_215 : f32 to vector<8x512xf32>
    %304 = arith.minimumf %303, %302 : vector<8x512xf32>
    %c0_216 = arith.constant 0 : index
    %c7_217 = arith.constant 7 : index
    %c0_218 = arith.constant 0 : index
    %c0_219 = arith.constant 0 : index
    %305 = vector.load %arg6[%c0_216, %c7_217, %c0_218, %c0_219] : memref<1x8x8x512xf32, #tpu.memory_space<vmem>>, vector<1x1x8x512xf32>
    %306 = vector.shape_cast %305 : vector<1x1x8x512xf32> to vector<8x512xf32>
    %307 = vector.shape_cast %304 : vector<8x512xf32> to vector<1x1x8x512xf32>
    tpu.vector_store %arg6[%c0_216, %c7_217, %c0_218, %c0_219], %307 {strides = array<i32>} : memref<1x8x8x512xf32, #tpu.memory_space<vmem>>, vector<1x1x8x512xf32>,
    return
  }
  func.func @transform_0(%arg0: i32) -> (i32, i32, i32) {
    %c0_i32 = arith.constant 0 : i32
    %c0_i32_0 = arith.constant 0 : i32
    %c0_i32_1 = arith.constant 0 : i32
    return %arg0, %c0_i32, %c0_i32_0 : i32, i32, i32
  }
  func.func @transform_1(%arg0: i32) -> (i32, i32) {
    %c0_i32 = arith.constant 0 : i32
    %c0_i32_0 = arith.constant 0 : i32
    %c0_i32_1 = arith.constant 0 : i32
    return %c0_i32, %c0_i32_0 : i32, i32
  }
  func.func @transform_2(%arg0: i32) -> (i32, i32) {
    %c0_i32 = arith.constant 0 : i32
    %c0_i32_0 = arith.constant 0 : i32
    %c0_i32_1 = arith.constant 0 : i32
    return %c0_i32, %c0_i32_0 : i32, i32
  }
  func.func @transform_3(%arg0: i32) -> (i32, i32) {
    %c0_i32 = arith.constant 0 : i32
    %c0_i32_0 = arith.constant 0 : i32
    %c0_i32_1 = arith.constant 0 : i32
    return %c0_i32, %c0_i32_0 : i32, i32
  }
  func.func @transform_4(%arg0: i32) -> (i32, i32) {
    %c0_i32 = arith.constant 0 : i32
    %c0_i32_0 = arith.constant 0 : i32
    %c0_i32_1 = arith.constant 0 : i32
    return %c0_i32, %c0_i32_0 : i32, i32
  }
  func.func @transform_5(%arg0: i32) -> (i32, i32, i32, i32) {
    %c0_i32 = arith.constant 0 : i32
    %c0_i32_0 = arith.constant 0 : i32
    %c0_i32_1 = arith.constant 0 : i32
    %c0_i32_2 = arith.constant 0 : i32
    return %arg0, %c0_i32, %c0_i32_0, %c0_i32_1 : i32, i32, i32, i32
  }
}

</mosaic_0001>

<llo_original>
// kernel: multi_decoder3d.1
$region0: #{multi_decoder3d.1}
  #allocation0 [shape = 'u32[]', space=smem, size = 0x4, offset = 0x4, fixed_abs, tag = 'smem constant byte address 0x4 - core index']
  #allocation1 [shape = 'u32[72,128]{1,0:T(1,128)}', space=vmem, size = 0x9000, scoped, tag = 'internal scratch']
  %s0 = inlined_call_operand.vmem [shape: f32[2,9,512], index: 0, kind: input, shape index: {}]
  %s1 = inlined_call_operand.vmem [shape: f32[72,9], index: 1, kind: input, shape index: {}]
  %s2 = inlined_call_operand.vmem [shape: f32[6,512], index: 2, kind: input, shape index: {}]
  %s3 = inlined_call_operand.vmem [shape: f32[8,1], index: 3, kind: input, shape index: {}]
  %s4 = inlined_call_operand.vmem [shape: f32[8,1], index: 4, kind: input, shape index: {}]
  %s5 = inlined_call_operand.vmem [shape: f32[2,8,8,512], index: 5, kind: output, shape index: {}]
  %s6 = sld [smem:[#allocation0]]
  $region53: #{multi_decoder3d.1} parent=0
    _
  %s8 = ssub.s32 1, %s6
  %s9 = scalar_select 0, %s8, %s6
  loop: start=0, step=1, limit=4
  $region2: #{multi_decoder3d.1} parent=0 // loop_pre_header
    _
  $region3: #{multi_decoder3d.1} parent=0 // loop_header
    %s11 = sphi 0, %s15
    %p12 = scmp.ge.s32.totalorder %s11, 4
    %s21 = sphi 0, %s23
    %s24 = sphi 0, %s21
    %s25 = sphi 0, %s24
    %s41 = sphi 0, %s25
    %s45 = sphi 0, %s45
    %s47 = sphi 0, %s45
    %s48 = sphi 0, %s47
    %s62 = sphi 0, %s48
    %s66 = sphi 0, %s66
    %s68 = sphi 0, %s66
    %s69 = sphi 0, %s68
    %s83 = sphi 0, %s69
    %s87 = sphi 0, %s87
    %s89 = sphi 0, %s87
    %s90 = sphi 0, %s89
    %s104 = sphi 0, %s90
    %s108 = sphi 0, %s108
    %s110 = sphi 0, %s108
    %s111 = sphi 0, %s110
    %s125 = sphi 0, %s111
    %s131 = sphi 0, %s133
    %s134 = sphi 0, %s131
    %s135 = sphi 0, %s134
    %s151 = sphi 0, %s135
  $region4: #{multi_decoder3d.1} parent=0 // loop_header_branch
    %14 = sbr.rel (%p12) target = $region8
  $region5: #{multi_decoder3d.1} parent=0 // loop_body
    %s16 = ssub.s32 %s11, 1
    %s17 = ssub.s32 %s11, 2
    %s18 = sadd.s32 %s11, 1
    %s19 = ssub.s32 %s11, %s18
    %p20 = scmp.eq.s32.totalorder %s19, 0
    %s22 = sadd.s32 %s21, 1
    %s23 = scalar_select %p20, %s21, %s22
    %p26 = pneg %p20
    %p27 = scmp.eq.s32.totalorder %s11, 1
    %p28 = por %p26, %p27
    %p29 = scmp.ne.s32.totalorder %s21, %s24
    %p30 = scmp.eq.s32.totalorder %s11, 0
    %p31 = por %p29, %p30
    %p32 = scmp.ne.s32.totalorder %s21, %s24
    %p33 = scmp.eq.s32.totalorder %s16, 1
    %p34 = por %p32, %p33
    %p35 = scmp.ne.s32.totalorder %s24, %s25
    %p36 = scmp.eq.s32.totalorder %s16, 0
    %p37 = por %p35, %p36
    %p38 = scmp.ne.s32.totalorder %s24, %s25
    %p39 = scmp.eq.s32.totalorder %s17, 1
    %p40 = por %p38, %p39
    %p42 = scmp.ne.s32.totalorder %s25, %s41
    %p43 = scmp.eq.s32.totalorder %s17, 0
    %p44 = por %p42, %p43
    %s46 = sadd.s32 %s45, 1
    %p49 = scmp.eq.s32.totalorder %s11, 1
    %p50 = scmp.ne.s32.totalorder %s45, %s47
    %p51 = scmp.eq.s32.totalorder %s11, 0
    %p52 = por %p50, %p51
    %p53 = scmp.ne.s32.totalorder %s45, %s47
    %p54 = scmp.eq.s32.totalorder %s16, 1
    %p55 = por %p53, %p54
    %p56 = scmp.ne.s32.totalorder %s47, %s48
    %p57 = scmp.eq.s32.totalorder %s16, 0
    %p58 = por %p56, %p57
    %p59 = scmp.ne.s32.totalorder %s47, %s48
    %p60 = scmp.eq.s32.totalorder %s17, 1
    %p61 = por %p59, %p60
    %p63 = scmp.ne.s32.totalorder %s48, %s62
    %p64 = scmp.eq.s32.totalorder %s17, 0
    %p65 = por %p63, %p64
    %s67 = sadd.s32 %s66, 1
    %p70 = scmp.eq.s32.totalorder %s11, 1
    %p71 = scmp.ne.s32.totalorder %s66, %s68
    %p72 = scmp.eq.s32.totalorder %s11, 0
    %p73 = por %p71, %p72
    %p74 = scmp.ne.s32.totalorder %s66, %s68
    %p75 = scmp.eq.s32.totalorder %s16, 1
    %p76 = por %p74, %p75
    %p77 = scmp.ne.s32.totalorder %s68, %s69
    %p78 = scmp.eq.s32.totalorder %s16, 0
    %p79 = por %p77, %p78
    %p80 = scmp.ne.s32.totalorder %s68, %s69
    %p81 = scmp.eq.s32.totalorder %s17, 1
    %p82 = por %p80, %p81
    %p84 = scmp.ne.s32.totalorder %s69, %s83
    %p85 = scmp.eq.s32.totalorder %s17, 0
    %p86 = por %p84, %p85
    %s88 = sadd.s32 %s87, 1
    %p91 = scmp.eq.s32.totalorder %s11, 1
    %p92 = scmp.ne.s32.totalorder %s87, %s89
    %p93 = scmp.eq.s32.totalorder %s11, 0
    %p94 = por %p92, %p93
    %p95 = scmp.ne.s32.totalorder %s87, %s89
    %p96 = scmp.eq.s32.totalorder %s16, 1
    %p97 = por %p95, %p96
    %p98 = scmp.ne.s32.totalorder %s89, %s90
    %p99 = scmp.eq.s32.totalorder %s16, 0
    %p100 = por %p98, %p99
    %p101 = scmp.ne.s32.totalorder %s89, %s90
    %p102 = scmp.eq.s32.totalorder %s17, 1
    %p103 = por %p101, %p102
    %p105 = scmp.ne.s32.totalorder %s90, %s104
    %p106 = scmp.eq.s32.totalorder %s17, 0
    %p107 = por %p105, %p106
    %s109 = sadd.s32 %s108, 1
    %p112 = scmp.eq.s32.totalorder %s11, 1
    %p113 = scmp.ne.s32.totalorder %s108, %s110
    %p114 = scmp.eq.s32.totalorder %s11, 0
    %p115 = por %p113, %p114
    %p116 = scmp.ne.s32.totalorder %s108, %s110
    %p117 = scmp.eq.s32.totalorder %s16, 1
    %p118 = por %p116, %p117
    %p119 = scmp.ne.s32.totalorder %s110, %s111
    %p120 = scmp.eq.s32.totalorder %s16, 0
    %p121 = por %p119, %p120
    %p122 = scmp.ne.s32.totalorder %s110, %s111
    %p123 = scmp.eq.s32.totalorder %s17, 1
    %p124 = por %p122, %p123
    %p126 = scmp.ne.s32.totalorder %s111, %s125
    %p127 = scmp.eq.s32.totalorder %s17, 0
    %p128 = por %p126, %p127
    %s129 = ssub.s32 %s11, %s18
    %p130 = scmp.eq.s32.totalorder %s129, 0
    %s132 = sadd.s32 %s131, 1
    %s133 = scalar_select %p130, %s131, %s132
    %p136 = pneg %p130
    %p137 = scmp.eq.s32.totalorder %s11, 1
    %p138 = por %p136, %p137
    %p139 = scmp.ne.s32.totalorder %s131, %s134
    %p140 = scmp.eq.s32.totalorder %s11, 0
    %p141 = por %p139, %p140
    %p142 = scmp.ne.s32.totalorder %s131, %s134
    %p143 = scmp.eq.s32.totalorder %s16, 1
    %p144 = por %p142, %p143
    %p145 = scmp.ne.s32.totalorder %s134, %s135
    %p146 = scmp.eq.s32.totalorder %s16, 0
    %p147 = por %p145, %p146
    %p148 = scmp.ne.s32.totalorder %s134, %s135
    %p149 = scmp.eq.s32.totalorder %s17, 1
    %p150 = por %p148, %p149
    %p152 = scmp.ne.s32.totalorder %s135, %s151
    %p153 = scmp.eq.s32.totalorder %s17, 0
    %p154 = por %p152, %p153
    %p155 = scmp.le.s32.totalorder 1, %s11
    %p156 = scmp.lt.s32.totalorder %s11, 3
    %p157 = pnand %p155, %p156
    %p158 = pneg %p157
    // Predicated region
    $region9: #{multi_decoder3d.1} parent=5 // pred_check
      _
    $region10: #{multi_decoder3d.1} parent=5 // pred_check_branch
      %160 = sbr.rel (%p157) target = $region12
    $region11: #{multi_decoder3d.1} parent=5 // pred_region
      %s161 = ssub.s32 %s11, 1
      // Predicated region
      $region13: #{multi_decoder3d.1} parent=11 // pred_check
        %p162 = pneg %p58
      $region14: #{multi_decoder3d.1} parent=11 // pred_check_branch
        %164 = sbr.rel (%p162) target = $region16
      $region15: #{multi_decoder3d.1} parent=11 // pred_region
        _
      $region16: #{multi_decoder3d.1} parent=11 // pred_fallthru
        _
      // Predicated region
      $region17: #{multi_decoder3d.1} parent=11 // pred_check
        %p165 = pneg %p79
      $region18: #{multi_decoder3d.1} parent=11 // pred_check_branch
        %167 = sbr.rel (%p165) target = $region20
      $region19: #{multi_decoder3d.1} parent=11 // pred_region
        _
      $region20: #{multi_decoder3d.1} parent=11 // pred_fallthru
        _
      // Predicated region
      $region21: #{multi_decoder3d.1} parent=11 // pred_check
        %p168 = pneg %p100
      $region22: #{multi_decoder3d.1} parent=11 // pred_check_branch
        %170 = sbr.rel (%p168) target = $region24
      $region23: #{multi_decoder3d.1} parent=11 // pred_region
        _
      $region24: #{multi_decoder3d.1} parent=11 // pred_fallthru
        _
      // Predicated region
      $region25: #{multi_decoder3d.1} parent=11 // pred_check
        %p171 = pneg %p121
      $region26: #{multi_decoder3d.1} parent=11 // pred_check_branch
        %173 = sbr.rel (%p171) target = $region28
      $region27: #{multi_decoder3d.1} parent=11 // pred_region
        _
      $region28: #{multi_decoder3d.1} parent=11 // pred_fallthru
        _
    $region12: #{multi_decoder3d.1} parent=5 // pred_fallthru
      _
    %p174 = scmp.lt.s32.totalorder %s11, 2
    // Predicated region
    $region29: #{multi_decoder3d.1} parent=5 // pred_check
      %p175 = pneg %p174
    $region30: #{multi_decoder3d.1} parent=5 // pred_check_branch
      %177 = sbr.rel (%p175) target = $region32
    $region31: #{multi_decoder3d.1} parent=5 // pred_region
      // Predicated region
      $region33: #{multi_decoder3d.1} parent=31 // pred_check
        %p178 = pneg %p31
      $region34: #{multi_decoder3d.1} parent=31 // pred_check_branch
        %180 = sbr.rel (%p178) target = $region36
      $region35: #{multi_decoder3d.1} parent=31 // pred_region
        %p181 = scmp.lt.s32.totalorder %s11, 1
        %s182 = scalar_select %p181, %s11, 1
        %s183 = smul.addr %s182, 8
        %s184 = smul.addr %s183, 8
        %s185 = scalar_lea.vmem %s0, %s184
      $region36: #{multi_decoder3d.1} parent=31 // pred_fallthru
        _
    $region32: #{multi_decoder3d.1} parent=5 // pred_fallthru
      _
    %p186 = scmp.le.s32.totalorder 1, %s11
    %p187 = scmp.lt.s32.totalorder %s11, 3
    %p188 = pnand %p186, %p187
    %p189 = pneg %p188
    // Predicated region
    $region37: #{multi_decoder3d.1} parent=5 // pred_check
      _
    $region38: #{multi_decoder3d.1} parent=5 // pred_check_branch
      %191 = sbr.rel (%p188) target = $region40
    $region39: #{multi_decoder3d.1} parent=5 // pred_region
      %s192 = ssub.s32 %s11, 1
      %p193 = scmp.lt.s32.totalorder %s16, 1
      %s194 = scalar_select %p193, %s16, 1
      %s195 = smul.addr %s194, 8
      %s196 = smul.addr %s195, 8
      %s197 = scalar_lea.vmem %s0, %s196
      %p198 = pneg %p37
      %p199 = pneg %p34
      %p200 = pneg %p58
      %p201 = pneg %p55
      %p202 = pneg %p79
      %p203 = pneg %p76
      %p204 = pneg %p100
      %p205 = pneg %p97
      %p206 = pneg %p121
      %p207 = pneg %p118
      %p208 = pneg %p147
      %p209 = pneg %p144
      %p210 = scmp.lt.s32.totalorder %s16, 1
      %s211 = scalar_select %p210, %s16, 1
      %s212 = smul.addr %s211, 32
      %s213 = smul.addr %s212, 8
      %s214 = scalar_lea.vmem %s5, %s213
      %p215 = scmp.lt.s32.totalorder %s16, 1
      %s216 = scalar_select %p215, %s16, 1
      %s217 = smul.addr %s216, 8
      %s218 = smul.addr %s217, 8
      %s219 = scalar_lea.vmem %s0, %s218
      %p220 = scmp.lt.s32.totalorder %s16, 1
      %s221 = scalar_select %p220, %s16, 1
      %s222 = smul.addr %s221, 32
      %s223 = smul.addr %s222, 8
      %s224 = scalar_lea.vmem %s5, %s223
      %v225 = vld [vmem:[%s219] sm:$0xff]
      %v226 = vld [vmem:[%s219 + $0x8] sm:$0xff]
      %v227 = vld [vmem:[%s219 + $0x10] sm:$0xff]
      %v228 = vld [vmem:[%s219 + $0x18] sm:$0xff]
      %v229 = vld [vmem:[%s219 + $0x20] sm:$0x1]
      %v230 = vld [vmem:[%s219 + $0x28] sm:$0x1]
      %v231 = vld [vmem:[%s219 + $0x30] sm:$0x1]
      %v232 = vld [vmem:[%s219 + $0x38] sm:$0x1]
      %v233 = vld [vmem:[%s1] sm:$0xff]
      %v234 = vld [vmem:[%s1 + $0x8] sm:$0xff]
      %v235 = vld [vmem:[%s1 + $0x10] sm:$0xff]
      %v236 = vld [vmem:[%s1 + $0x18] sm:$0xff]
      %v237 = vld [vmem:[%s1 + $0x20] sm:$0xff]
      %v238 = vld [vmem:[%s1 + $0x28] sm:$0xff]
      %v239 = vld [vmem:[%s1 + $0x30] sm:$0xff]
      %v240 = vld [vmem:[%s1 + $0x38] sm:$0xff]
      %v241 = vld [vmem:[%s1 + $0x40] sm:$0xff]
      %vm242 = vcmask 72704
      %v244 = vsel %vm242, %v233, 0
      %v247 = vsel %vm242, %v234, 0
      %v250 = vsel %vm242, %v235, 0
      %v253 = vsel %vm242, %v236, 0
      %v256 = vsel %vm242, %v237, 0
      %v259 = vsel %vm242, %v238, 0
      %v262 = vsel %vm242, %v239, 0
      %v265 = vsel %vm242, %v240, 0
      %v268 = vsel %vm242, %v241, 0
      %vm270 = vcmask 1040384
      %v272 = vsel %vm270, %v229, 0
      %v275 = vsel %vm270, %v230, 0
      %v278 = vsel %vm270, %v231, 0
      %v281 = vsel %vm270, %v232, 0
      %283 = vmatpush.msra.mxu0 0.0
      %284 = vmatpush.msra.mxu0 0.0
      %285 = vmatpush.msra.mxu0 0.0
      %286 = vmatpush.msra.mxu0 0.0
      %287 = vmatpush.msra.mxu0 0.0
      %288 = vmatpush.msra.mxu0 0.0
      %289 = vmatpush.msra.mxu0 0.0
      %290 = vmatpush.msra.mxu0 0.0
      %291 = vmatpush.msra.mxu0 0.0
      %292 = vmatpush.msra.mxu0 0.0
      %293 = vmatpush.msra.mxu0 0.0
      %294 = vmatpush.msra.mxu0 0.0
      %295 = vmatpush.msra.mxu0 0.0
      %296 = vmatpush.msra.mxu0 0.0
      %297 = vmatpush.msra.mxu0 %v272
      %298 = vmatpush.msra.mxu0 %v225
      %299 = vmatmul.f32.gmra.mxu0 %v244
      %v300 = vpop.f32.mrf.mxu0
      %v301 = vadd.f32 0.0, %v300
      %302 = vmatmul.f32.gmra.mxu0 %v247
      %v303 = vpop.f32.mrf.mxu0
      %v304 = vadd.f32 0.0, %v303
      %305 = vmatmul.f32.gmra.mxu0 %v250
      %v306 = vpop.f32.mrf.mxu0
      %v307 = vadd.f32 0.0, %v306
      %308 = vmatmul.f32.gmra.mxu0 %v253
      %v309 = vpop.f32.mrf.mxu0
      %v310 = vadd.f32 0.0, %v309
      %311 = vmatmul.f32.gmra.mxu0 %v256
      %v312 = vpop.f32.mrf.mxu0
      %v313 = vadd.f32 0.0, %v312
      %314 = vmatmul.f32.gmra.mxu0 %v259
      %v315 = vpop.f32.mrf.mxu0
      %v316 = vadd.f32 0.0, %v315
      %317 = vmatmul.f32.gmra.mxu0 %v262
      %v318 = vpop.f32.mrf.mxu0
      %v319 = vadd.f32 0.0, %v318
      %320 = vmatmul.f32.gmra.mxu0 %v265
      %v321 = vpop.f32.mrf.mxu0
      %v322 = vadd.f32 0.0, %v321
      %323 = vmatmul.f32.gmra.mxu0 %v268
      %v324 = vpop.f32.mrf.mxu0
      %v325 = vadd.f32 0.0, %v324
      %326 = vdwg.mxu0
      %327 = vmatpush.msra.mxu0 0.0
      %328 = vmatpush.msra.mxu0 0.0
      %329 = vmatpush.msra.mxu0 0.0
      %330 = vmatpush.msra.mxu0 0.0
      %331 = vmatpush.msra.mxu0 0.0
      %332 = vmatpush.msra.mxu0 0.0
      %333 = vmatpush.msra.mxu0 0.0
      %334 = vmatpush.msra.mxu0 0.0
      %335 = vmatpush.msra.mxu0 0.0
      %336 = vmatpush.msra.mxu0 0.0
      %337 = vmatpush.msra.mxu0 0.0
      %338 = vmatpush.msra.mxu0 0.0
      %339 = vmatpush.msra.mxu0 0.0
      %340 = vmatpush.msra.mxu0 0.0
      %341 = vmatpush.msra.mxu0 %v275
      %342 = vmatpush.msra.mxu0 %v226
      %343 = vmatmul.f32.gmra.mxu0 %v244
      %v344 = vpop.f32.mrf.mxu0
      %v345 = vadd.f32 0.0, %v344
      %346 = vmatmul.f32.gmra.mxu0 %v247
      %v347 = vpop.f32.mrf.mxu0
      %v348 = vadd.f32 0.0, %v347
      %349 = vmatmul.f32.gmra.mxu0 %v250
      %v350 = vpop.f32.mrf.mxu0
      %v351 = vadd.f32 0.0, %v350
      %352 = vmatmul.f32.gmra.mxu0 %v253
      %v353 = vpop.f32.mrf.mxu0
      %v354 = vadd.f32 0.0, %v353
      %355 = vmatmul.f32.gmra.mxu0 %v256
      %v356 = vpop.f32.mrf.mxu0
      %v357 = vadd.f32 0.0, %v356
      %358 = vmatmul.f32.gmra.mxu0 %v259
      %v359 = vpop.f32.mrf.mxu0
      %v360 = vadd.f32 0.0, %v359
      %361 = vmatmul.f32.gmra.mxu0 %v262
      %v362 = vpop.f32.mrf.mxu0
      %v363 = vadd.f32 0.0, %v362
      %364 = vmatmul.f32.gmra.mxu0 %v265
      %v365 = vpop.f32.mrf.mxu0
      %v366 = vadd.f32 0.0, %v365
      %367 = vmatmul.f32.gmra.mxu0 %v268
      %v368 = vpop.f32.mrf.mxu0
      %v369 = vadd.f32 0.0, %v368
      %370 = vdwg.mxu0
      %371 = vmatpush.msra.mxu0 0.0
      %372 = vmatpush.msra.mxu0 0.0
      %373 = vmatpush.msra.mxu0 0.0
      %374 = vmatpush.msra.mxu0 0.0
      %375 = vmatpush.msra.mxu0 0.0
      %376 = vmatpush.msra.mxu0 0.0
      %377 = vmatpush.msra.mxu0 0.0
      %378 = vmatpush.msra.mxu0 0.0
      %379 = vmatpush.msra.mxu0 0.0
      %380 = vmatpush.msra.mxu0 0.0
      %381 = vmatpush.msra.mxu0 0.0
      %382 = vmatpush.msra.mxu0 0.0
      %383 = vmatpush.msra.mxu0 0.0
      %384 = vmatpush.msra.mxu0 0.0
      %385 = vmatpush.msra.mxu0 %v278
      %386 = vmatpush.msra.mxu0 %v227
      %387 = vmatmul.f32.gmra.mxu0 %v244
      %v388 = vpop.f32.mrf.mxu0
      %v389 = vadd.f32 0.0, %v388
      %390 = vmatmul.f32.gmra.mxu0 %v247
      %v391 = vpop.f32.mrf.mxu0
      %v392 = vadd.f32 0.0, %v391
      %393 = vmatmul.f32.gmra.mxu0 %v250
      %v394 = vpop.f32.mrf.mxu0
      %v395 = vadd.f32 0.0, %v394
      %396 = vmatmul.f32.gmra.mxu0 %v253
      %v397 = vpop.f32.mrf.mxu0
      %v398 = vadd.f32 0.0, %v397
      %399 = vmatmul.f32.gmra.mxu0 %v256
      %v400 = vpop.f32.mrf.mxu0
      %v401 = vadd.f32 0.0, %v400
      %402 = vmatmul.f32.gmra.mxu0 %v259
      %v403 = vpop.f32.mrf.mxu0
      %v404 = vadd.f32 0.0, %v403
      %405 = vmatmul.f32.gmra.mxu0 %v262
      %v406 = vpop.f32.mrf.mxu0
      %v407 = vadd.f32 0.0, %v406
      %408 = vmatmul.f32.gmra.mxu0 %v265
      %v409 = vpop.f32.mrf.mxu0
      %v410 = vadd.f32 0.0, %v409
      %411 = vmatmul.f32.gmra.mxu0 %v268
      %v412 = vpop.f32.mrf.mxu0
      %v413 = vadd.f32 0.0, %v412
      %414 = vdwg.mxu0
      %415 = vmatpush.msra.mxu0 0.0
      %416 = vmatpush.msra.mxu0 0.0
      %417 = vmatpush.msra.mxu0 0.0
      %418 = vmatpush.msra.mxu0 0.0
      %419 = vmatpush.msra.mxu0 0.0
      %420 = vmatpush.msra.mxu0 0.0
      %421 = vmatpush.msra.mxu0 0.0
      %422 = vmatpush.msra.mxu0 0.0
      %423 = vmatpush.msra.mxu0 0.0
      %424 = vmatpush.msra.mxu0 0.0
      %425 = vmatpush.msra.mxu0 0.0
      %426 = vmatpush.msra.mxu0 0.0
      %427 = vmatpush.msra.mxu0 0.0
      %428 = vmatpush.msra.mxu0 0.0
      %429 = vmatpush.msra.mxu0 %v281
      %430 = vmatpush.msra.mxu0 %v228
      %431 = vmatmul.f32.gmra.mxu0 %v244
      %v432 = vpop.f32.mrf.mxu0
      %v433 = vadd.f32 0.0, %v432
      %434 = vmatmul.f32.gmra.mxu0 %v247
      %v435 = vpop.f32.mrf.mxu0
      %v436 = vadd.f32 0.0, %v435
      %437 = vmatmul.f32.gmra.mxu0 %v250
      %v438 = vpop.f32.mrf.mxu0
      %v439 = vadd.f32 0.0, %v438
      %440 = vmatmul.f32.gmra.mxu0 %v253
      %v441 = vpop.f32.mrf.mxu0
      %v442 = vadd.f32 0.0, %v441
      %443 = vmatmul.f32.gmra.mxu0 %v256
      %v444 = vpop.f32.mrf.mxu0
      %v445 = vadd.f32 0.0, %v444
      %446 = vmatmul.f32.gmra.mxu0 %v259
      %v447 = vpop.f32.mrf.mxu0
      %v448 = vadd.f32 0.0, %v447
      %449 = vmatmul.f32.gmra.mxu0 %v262
      %v450 = vpop.f32.mrf.mxu0
      %v451 = vadd.f32 0.0, %v450
      %452 = vmatmul.f32.gmra.mxu0 %v265
      %v453 = vpop.f32.mrf.mxu0
      %v454 = vadd.f32 0.0, %v453
      %455 = vmatmul.f32.gmra.mxu0 %v268
      %v456 = vpop.f32.mrf.mxu0
      %v457 = vadd.f32 0.0, %v456
      %458 = vdwg.mxu0
      %459 = vst [vmem:[%s224] sm:$0xff] %v301
      %460 = vst [vmem:[%s224 + $0x8] sm:$0xff] %v345
      %461 = vst [vmem:[%s224 + $0x10] sm:$0xff] %v389
      %462 = vst [vmem:[%s224 + $0x18] sm:$0xff] %v433
      %s463 = scalar_lea.vmem %s224, 32
      %464 = vst [vmem:[%s463] sm:$0xff] %v304
      %465 = vst [vmem:[%s463 + $0x8] sm:$0xff] %v348
      %466 = vst [vmem:[%s463 + $0x10] sm:$0xff] %v392
      %467 = vst [vmem:[%s463 + $0x18] sm:$0xff] %v436
      %s468 = scalar_lea.vmem %s224, 64
      %469 = vst [vmem:[%s468] sm:$0xff] %v307
      %470 = vst [vmem:[%s468 + $0x8] sm:$0xff] %v351
      %471 = vst [vmem:[%s468 + $0x10] sm:$0xff] %v395
      %472 = vst [vmem:[%s468 + $0x18] sm:$0xff] %v439
      %s473 = scalar_lea.vmem %s224, 96
      %474 = vst [vmem:[%s473] sm:$0xff] %v310
      %475 = vst [vmem:[%s473 + $0x8] sm:$0xff] %v354
      %476 = vst [vmem:[%s473 + $0x10] sm:$0xff] %v398
      %477 = vst [vmem:[%s473 + $0x18] sm:$0xff] %v442
      %s478 = scalar_lea.vmem %s224, 128
      %479 = vst [vmem:[%s478] sm:$0xff] %v313
      %480 = vst [vmem:[%s478 + $0x8] sm:$0xff] %v357
      %481 = vst [vmem:[%s478 + $0x10] sm:$0xff] %v401
      %482 = vst [vmem:[%s478 + $0x18] sm:$0xff] %v445
      %s483 = scalar_lea.vmem %s224, 160
      %484 = vst [vmem:[%s483] sm:$0xff] %v316
      %485 = vst [vmem:[%s483 + $0x8] sm:$0xff] %v360
      %486 = vst [vmem:[%s483 + $0x10] sm:$0xff] %v404
      %487 = vst [vmem:[%s483 + $0x18] sm:$0xff] %v448
      %s488 = scalar_lea.vmem %s224, 192
      %489 = vst [vmem:[%s488] sm:$0xff] %v319
      %490 = vst [vmem:[%s488 + $0x8] sm:$0xff] %v363
      %491 = vst [vmem:[%s488 + $0x10] sm:$0xff] %v407
      %492 = vst [vmem:[%s488 + $0x18] sm:$0xff] %v451
      %s493 = scalar_lea.vmem %s224, 224
      %494 = vst [vmem:[%s493] sm:$0xff] %v322
      %495 = vst [vmem:[%s493 + $0x8] sm:$0xff] %v366
      %496 = vst [vmem:[%s493 + $0x10] sm:$0xff] %v410
      %497 = vst [vmem:[%s493 + $0x18] sm:$0xff] %v454
      %498 = vrot.lane.b32.xlu0 %v325, 1
      %v499 = vpop.permute.xlu0 %498
      %500 = vrot.lane.b32.xlu0 %v369, 1
      %v501 = vpop.permute.xlu0 %500
      %502 = vrot.lane.b32.xlu0 %v413, 1
      %v503 = vpop.permute.xlu0 %502
      %504 = vrot.lane.b32.xlu0 %v457, 1
      %v505 = vpop.permute.xlu0 %504
      %v506 = vlaneseq
      %v507 = vand.u32 %v506, 127
      %vm508 = vcmp.lt.s32.totalorder %v507, 1
      %v509 = vsel %vm508, %v503, %v505
      %v510 = vsel %vm508, %v501, %v503
      %v511 = vsel %vm508, %v499, %v501
      %v512 = vsel %vm508, %v505, %v499
      %v513 = vld [vmem:[%s2] ss:$8 sm:$0xf]
      %v514 = vsub.f32 %v512, %v325
      %v515 = vsub.f32 %v511, %v369
      %v516 = vsub.f32 %v510, %v413
      %v517 = vsub.f32 %v509, %v457
      %v519 = vperm.slane %v513, 0
      %v520 = vperm.slane %v513, 1
      %v521 = vperm.slane %v513, 2
      %v522 = vperm.slane %v513, 3
      %v527 = vmul.f32 %v519, %v514
      %v528 = vmul.f32 %v520, %v515
      %v529 = vmul.f32 %v521, %v516
      %v530 = vmul.f32 %v522, %v517
      %v531 = vadd.f32 %v325, %v527
      %v532 = vadd.f32 %v369, %v528
      %v533 = vadd.f32 %v413, %v529
      %v534 = vadd.f32 %v457, %v530
      %535 = vrot.lane.b32.xlu0 %v325, 127
      %v536 = vpop.permute.xlu0 %535
      %537 = vrot.lane.b32.xlu0 %v369, 127
      %v538 = vpop.permute.xlu0 %537
      %539 = vrot.lane.b32.xlu0 %v413, 127
      %v540 = vpop.permute.xlu0 %539
      %541 = vrot.lane.b32.xlu0 %v457, 127
      %v542 = vpop.permute.xlu0 %541
      %vm543 = vcmp.lt.s32.totalorder %v507, 127
      %v544 = vsel %vm543, %v540, %v542
      %v545 = vsel %vm543, %v538, %v540
      %v546 = vsel %vm543, %v536, %v538
      %v547 = vsel %vm543, %v542, %v536
      %s548 = scalar_lea.vmem %s2, 1
      %v549 = vld [vmem:[%s548] ss:$8 sm:$0xf]
      %v550 = vsub.f32 %v546, %v325
      %v551 = vsub.f32 %v545, %v369
      %v552 = vsub.f32 %v544, %v413
      %v553 = vsub.f32 %v547, %v457
      %v555 = vperm.slane %v549, 0
      %v556 = vperm.slane %v549, 1
      %v557 = vperm.slane %v549, 2
      %v558 = vperm.slane %v549, 3
      %v563 = vmul.f32 %v555, %v550
      %v564 = vmul.f32 %v556, %v551
      %v565 = vmul.f32 %v557, %v552
      %v566 = vmul.f32 %v558, %v553
      %v567 = vadd.f32 %v325, %v563
      %v568 = vadd.f32 %v369, %v564
      %v569 = vadd.f32 %v413, %v565
      %v570 = vadd.f32 %v457, %v566
      %571 = vrot.lane.b32.xlu0 %v531, 8
      %v572 = vpop.permute.xlu0 %571
      %573 = vrot.lane.b32.xlu0 %v532, 8
      %v574 = vpop.permute.xlu0 %573
      %575 = vrot.lane.b32.xlu0 %v533, 8
      %v576 = vpop.permute.xlu0 %575
      %577 = vrot.lane.b32.xlu0 %v534, 8
      %v578 = vpop.permute.xlu0 %577
      %vm579 = vcmp.lt.s32.totalorder %v507, 8
      %v580 = vsel %vm579, %v576, %v578
      %v581 = vsel %vm579, %v574, %v576
      %v582 = vsel %vm579, %v572, %v574
      %v583 = vsel %vm579, %v578, %v572
      %s584 = scalar_lea.vmem %s2, 2
      %v585 = vld [vmem:[%s584] ss:$8 sm:$0xf]
      %v586 = vsub.f32 %v583, %v531
      %v587 = vsub.f32 %v582, %v532
      %v588 = vsub.f32 %v581, %v533
      %v589 = vsub.f32 %v580, %v534
      %v591 = vperm.slane %v585, 0
      %v592 = vperm.slane %v585, 1
      %v593 = vperm.slane %v585, 2
      %v594 = vperm.slane %v585, 3
      %v599 = vmul.f32 %v591, %v586
      %v600 = vmul.f32 %v592, %v587
      %v601 = vmul.f32 %v593, %v588
      %v602 = vmul.f32 %v594, %v589
      %v603 = vadd.f32 %v531, %v599
      %v604 = vadd.f32 %v532, %v600
      %v605 = vadd.f32 %v533, %v601
      %v606 = vadd.f32 %v534, %v602
      %607 = vrot.lane.b32.xlu0 %v531, 120
      %v608 = vpop.permute.xlu0 %607
      %609 = vrot.lane.b32.xlu0 %v532, 120
      %v610 = vpop.permute.xlu0 %609
      %611 = vrot.lane.b32.xlu0 %v533, 120
      %v612 = vpop.permute.xlu0 %611
      %613 = vrot.lane.b32.xlu0 %v534, 120
      %v614 = vpop.permute.xlu0 %613
      %vm615 = vcmp.lt.s32.totalorder %v507, 120
      %v616 = vsel %vm615, %v612, %v614
      %v617 = vsel %vm615, %v610, %v612
      %v618 = vsel %vm615, %v608, %v610
      %v619 = vsel %vm615, %v614, %v608
      %s620 = scalar_lea.vmem %s2, 3
      %v621 = vld [vmem:[%s620] ss:$8 sm:$0xf]
      %v622 = vsub.f32 %v618, %v531
      %v623 = vsub.f32 %v617, %v532
      %v624 = vsub.f32 %v616, %v533
      %v625 = vsub.f32 %v619, %v534
      %v627 = vperm.slane %v621, 0
      %v628 = vperm.slane %v621, 1
      %v629 = vperm.slane %v621, 2
      %v630 = vperm.slane %v621, 3
      %v635 = vmul.f32 %v627, %v622
      %v636 = vmul.f32 %v628, %v623
      %v637 = vmul.f32 %v629, %v624
      %v638 = vmul.f32 %v630, %v625
      %v639 = vadd.f32 %v531, %v635
      %v640 = vadd.f32 %v532, %v636
      %v641 = vadd.f32 %v533, %v637
      %v642 = vadd.f32 %v534, %v638
      %643 = vrot.lane.b32.xlu0 %v567, 8
      %v644 = vpop.permute.xlu0 %643
      %645 = vrot.lane.b32.xlu0 %v568, 8
      %v646 = vpop.permute.xlu0 %645
      %647 = vrot.lane.b32.xlu0 %v569, 8
      %v648 = vpop.permute.xlu0 %647
      %649 = vrot.lane.b32.xlu0 %v570, 8
      %v650 = vpop.permute.xlu0 %649
      %v651 = vsel %vm579, %v648, %v650
      %v652 = vsel %vm579, %v646, %v648
      %v653 = vsel %vm579, %v644, %v646
      %v654 = vsel %vm579, %v650, %v644
      %v655 = vsub.f32 %v654, %v567
      %v656 = vsub.f32 %v653, %v568
      %v657 = vsub.f32 %v652, %v569
      %v658 = vsub.f32 %v651, %v570
      %v659 = vmul.f32 %v591, %v655
      %v660 = vmul.f32 %v592, %v656
      %v661 = vmul.f32 %v593, %v657
      %v662 = vmul.f32 %v594, %v658
      %v663 = vadd.f32 %v567, %v659
      %v664 = vadd.f32 %v568, %v660
      %v665 = vadd.f32 %v569, %v661
      %v666 = vadd.f32 %v570, %v662
      %667 = vrot.lane.b32.xlu0 %v567, 120
      %v668 = vpop.permute.xlu0 %667
      %669 = vrot.lane.b32.xlu0 %v568, 120
      %v670 = vpop.permute.xlu0 %669
      %671 = vrot.lane.b32.xlu0 %v569, 120
      %v672 = vpop.permute.xlu0 %671
      %673 = vrot.lane.b32.xlu0 %v570, 120
      %v674 = vpop.permute.xlu0 %673
      %v675 = vsel %vm615, %v672, %v674
      %v676 = vsel %vm615, %v670, %v672
      %v677 = vsel %vm615, %v668, %v670
      %v678 = vsel %vm615, %v674, %v668
      %v679 = vsub.f32 %v677, %v567
      %v680 = vsub.f32 %v676, %v568
      %v681 = vsub.f32 %v675, %v569
      %v682 = vsub.f32 %v678, %v570
      %v683 = vmul.f32 %v627, %v679
      %v684 = vmul.f32 %v628, %v680
      %v685 = vmul.f32 %v629, %v681
      %v686 = vmul.f32 %v630, %v682
      %v687 = vadd.f32 %v567, %v683
      %v688 = vadd.f32 %v568, %v684
      %v689 = vadd.f32 %v569, %v685
      %v690 = vadd.f32 %v570, %v686
      %v691 = vld [vmem:[%s224] sm:$0xff]
      %v692 = vld [vmem:[%s224 + $0x8] sm:$0xff]
      %v693 = vld [vmem:[%s224 + $0x10] sm:$0xff]
      %v694 = vld [vmem:[%s224 + $0x18] sm:$0xff]
      %695 = vrot.lane.b32.xlu0 %v603, 64
      %v696 = vpop.permute.xlu0 %695
      %697 = vrot.lane.b32.xlu0 %v604, 64
      %v698 = vpop.permute.xlu0 %697
      %699 = vrot.lane.b32.xlu0 %v605, 64
      %v700 = vpop.permute.xlu0 %699
      %701 = vrot.lane.b32.xlu0 %v606, 64
      %v702 = vpop.permute.xlu0 %701
      %vm703 = vcmp.lt.s32.totalorder %v507, 64
      %v704 = vsel %vm703, %v700, %v702
      %v705 = vsel %vm703, %v698, %v700
      %v706 = vsel %vm703, %v696, %v698
      %v707 = vsel %vm703, %v702, %v696
      %s708 = scalar_lea.vmem %s2, 4
      %v709 = vld [vmem:[%s708] ss:$8 sm:$0xf]
      %v710 = vsub.f32 %v707, %v603
      %v711 = vsub.f32 %v706, %v604
      %v712 = vsub.f32 %v705, %v605
      %v713 = vsub.f32 %v704, %v606
      %v715 = vperm.slane %v709, 0
      %v716 = vperm.slane %v709, 1
      %v717 = vperm.slane %v709, 2
      %v718 = vperm.slane %v709, 3
      %v723 = vmul.f32 %v715, %v710
      %v724 = vmul.f32 %v716, %v711
      %v725 = vmul.f32 %v717, %v712
      %v726 = vmul.f32 %v718, %v713
      %v727 = vadd.f32 %v603, %v723
      %v728 = vadd.f32 %v604, %v724
      %v729 = vadd.f32 %v605, %v725
      %v730 = vadd.f32 %v606, %v726
      %v731 = vadd.f32 %v691, %v727
      %v732 = vadd.f32 %v692, %v728
      %v733 = vadd.f32 %v693, %v729
      %v734 = vadd.f32 %v694, %v730
      %735 = vst [vmem:[%s224] sm:$0xff] %v731
      %736 = vst [vmem:[%s224 + $0x8] sm:$0xff] %v732
      %737 = vst [vmem:[%s224 + $0x10] sm:$0xff] %v733
      %738 = vst [vmem:[%s224 + $0x18] sm:$0xff] %v734
      %v739 = vadd.f32 %v731, 0.0
      %v740 = vadd.f32 %v732, 0.0
      %v741 = vadd.f32 %v733, 0.0
      %v742 = vadd.f32 %v734, 0.0
      %v743 = vmul.f32 %v731, %v731
      %v744 = vmul.f32 %v732, %v732
      %v745 = vmul.f32 %v733, %v733
      %v746 = vmul.f32 %v734, %v734
      %v747 = vadd.f32 %v743, 0.0
      %v748 = vadd.f32 %v744, 0.0
      %v749 = vadd.f32 %v745, 0.0
      %v750 = vadd.f32 %v746, 0.0
      %v751 = vld [vmem:[%s463] sm:$0xff]
      %v752 = vld [vmem:[%s463 + $0x8] sm:$0xff]
      %v753 = vld [vmem:[%s463 + $0x10] sm:$0xff]
      %v754 = vld [vmem:[%s463 + $0x18] sm:$0xff]
      %755 = vrot.lane.b32.xlu0 %v663, 64
      %v756 = vpop.permute.xlu0 %755
      %757 = vrot.lane.b32.xlu0 %v664, 64
      %v758 = vpop.permute.xlu0 %757
      %759 = vrot.lane.b32.xlu0 %v665, 64
      %v760 = vpop.permute.xlu0 %759
      %761 = vrot.lane.b32.xlu0 %v666, 64
      %v762 = vpop.permute.xlu0 %761
      %v763 = vsel %vm703, %v760, %v762
      %v764 = vsel %vm703, %v758, %v760
      %v765 = vsel %vm703, %v756, %v758
      %v766 = vsel %vm703, %v762, %v756
      %v767 = vld [vmem:[%s708] ss:$8 sm:$0xf]
      %v768 = vsub.f32 %v766, %v663
      %v769 = vsub.f32 %v765, %v664
      %v770 = vsub.f32 %v764, %v665
      %v771 = vsub.f32 %v763, %v666
      %v773 = vperm.slane %v767, 0
      %v774 = vperm.slane %v767, 1
      %v775 = vperm.slane %v767, 2
      %v776 = vperm.slane %v767, 3
      %v781 = vmul.f32 %v773, %v768
      %v782 = vmul.f32 %v774, %v769
      %v783 = vmul.f32 %v775, %v770
      %v784 = vmul.f32 %v776, %v771
      %v785 = vadd.f32 %v663, %v781
      %v786 = vadd.f32 %v664, %v782
      %v787 = vadd.f32 %v665, %v783
      %v788 = vadd.f32 %v666, %v784
      %v789 = vadd.f32 %v751, %v785
      %v790 = vadd.f32 %v752, %v786
      %v791 = vadd.f32 %v753, %v787
      %v792 = vadd.f32 %v754, %v788
      %793 = vst [vmem:[%s463] sm:$0xff] %v789
      %794 = vst [vmem:[%s463 + $0x8] sm:$0xff] %v790
      %795 = vst [vmem:[%s463 + $0x10] sm:$0xff] %v791
      %796 = vst [vmem:[%s463 + $0x18] sm:$0xff] %v792
      %v797 = vadd.f32 %v739, %v789
      %v798 = vadd.f32 %v740, %v790
      %v799 = vadd.f32 %v741, %v791
      %v800 = vadd.f32 %v742, %v792
      %v801 = vmul.f32 %v789, %v789
      %v802 = vmul.f32 %v790, %v790
      %v803 = vmul.f32 %v791, %v791
      %v804 = vmul.f32 %v792, %v792
      %v805 = vadd.f32 %v747, %v801
      %v806 = vadd.f32 %v748, %v802
      %v807 = vadd.f32 %v749, %v803
      %v808 = vadd.f32 %v750, %v804
      %v809 = vld [vmem:[%s468] sm:$0xff]
      %v810 = vld [vmem:[%s468 + $0x8] sm:$0xff]
      %v811 = vld [vmem:[%s468 + $0x10] sm:$0xff]
      %v812 = vld [vmem:[%s468 + $0x18] sm:$0xff]
      %813 = vrot.lane.b32.xlu0 %v639, 64
      %v814 = vpop.permute.xlu0 %813
      %815 = vrot.lane.b32.xlu0 %v640, 64
      %v816 = vpop.permute.xlu0 %815
      %817 = vrot.lane.b32.xlu0 %v641, 64
      %v818 = vpop.permute.xlu0 %817
      %819 = vrot.lane.b32.xlu0 %v642, 64
      %v820 = vpop.permute.xlu0 %819
      %v821 = vsel %vm703, %v818, %v820
      %v822 = vsel %vm703, %v816, %v818
      %v823 = vsel %vm703, %v814, %v816
      %v824 = vsel %vm703, %v820, %v814
      %v825 = vld [vmem:[%s708] ss:$8 sm:$0xf]
      %v826 = vsub.f32 %v824, %v639
      %v827 = vsub.f32 %v823, %v640
      %v828 = vsub.f32 %v822, %v641
      %v829 = vsub.f32 %v821, %v642
      %v831 = vperm.slane %v825, 0
      %v832 = vperm.slane %v825, 1
      %v833 = vperm.slane %v825, 2
      %v834 = vperm.slane %v825, 3
      %v839 = vmul.f32 %v831, %v826
      %v840 = vmul.f32 %v832, %v827
      %v841 = vmul.f32 %v833, %v828
      %v842 = vmul.f32 %v834, %v829
      %v843 = vadd.f32 %v639, %v839
      %v844 = vadd.f32 %v640, %v840
      %v845 = vadd.f32 %v641, %v841
      %v846 = vadd.f32 %v642, %v842
      %v847 = vadd.f32 %v809, %v843
      %v848 = vadd.f32 %v810, %v844
      %v849 = vadd.f32 %v811, %v845
      %v850 = vadd.f32 %v812, %v846
      %851 = vst [vmem:[%s468] sm:$0xff] %v847
      %852 = vst [vmem:[%s468 + $0x8] sm:$0xff] %v848
      %853 = vst [vmem:[%s468 + $0x10] sm:$0xff] %v849
      %854 = vst [vmem:[%s468 + $0x18] sm:$0xff] %v850
      %v855 = vadd.f32 %v797, %v847
      %v856 = vadd.f32 %v798, %v848
      %v857 = vadd.f32 %v799, %v849
      %v858 = vadd.f32 %v800, %v850
      %v859 = vmul.f32 %v847, %v847
      %v860 = vmul.f32 %v848, %v848
      %v861 = vmul.f32 %v849, %v849
      %v862 = vmul.f32 %v850, %v850
      %v863 = vadd.f32 %v805, %v859
      %v864 = vadd.f32 %v806, %v860
      %v865 = vadd.f32 %v807, %v861
      %v866 = vadd.f32 %v808, %v862
      %v867 = vld [vmem:[%s473] sm:$0xff]
      %v868 = vld [vmem:[%s473 + $0x8] sm:$0xff]
      %v869 = vld [vmem:[%s473 + $0x10] sm:$0xff]
      %v870 = vld [vmem:[%s473 + $0x18] sm:$0xff]
      %871 = vrot.lane.b32.xlu0 %v687, 64
      %v872 = vpop.permute.xlu0 %871
      %873 = vrot.lane.b32.xlu0 %v688, 64
      %v874 = vpop.permute.xlu0 %873
      %875 = vrot.lane.b32.xlu0 %v689, 64
      %v876 = vpop.permute.xlu0 %875
      %877 = vrot.lane.b32.xlu0 %v690, 64
      %v878 = vpop.permute.xlu0 %877
      %v879 = vsel %vm703, %v876, %v878
      %v880 = vsel %vm703, %v874, %v876
      %v881 = vsel %vm703, %v872, %v874
      %v882 = vsel %vm703, %v878, %v872
      %v883 = vld [vmem:[%s708] ss:$8 sm:$0xf]
      %v884 = vsub.f32 %v882, %v687
      %v885 = vsub.f32 %v881, %v688
      %v886 = vsub.f32 %v880, %v689
      %v887 = vsub.f32 %v879, %v690
      %v889 = vperm.slane %v883, 0
      %v890 = vperm.slane %v883, 1
      %v891 = vperm.slane %v883, 2
      %v892 = vperm.slane %v883, 3
      %v897 = vmul.f32 %v889, %v884
      %v898 = vmul.f32 %v890, %v885
      %v899 = vmul.f32 %v891, %v886
      %v900 = vmul.f32 %v892, %v887
      %v901 = vadd.f32 %v687, %v897
      %v902 = vadd.f32 %v688, %v898
      %v903 = vadd.f32 %v689, %v899
      %v904 = vadd.f32 %v690, %v900
      %v905 = vadd.f32 %v867, %v901
      %v906 = vadd.f32 %v868, %v902
      %v907 = vadd.f32 %v869, %v903
      %v908 = vadd.f32 %v870, %v904
      %909 = vst [vmem:[%s473] sm:$0xff] %v905
      %910 = vst [vmem:[%s473 + $0x8] sm:$0xff] %v906
      %911 = vst [vmem:[%s473 + $0x10] sm:$0xff] %v907
      %912 = vst [vmem:[%s473 + $0x18] sm:$0xff] %v908
      %v913 = vadd.f32 %v855, %v905
      %v914 = vadd.f32 %v856, %v906
      %v915 = vadd.f32 %v857, %v907
      %v916 = vadd.f32 %v858, %v908
      %v917 = vmul.f32 %v905, %v905
      %v918 = vmul.f32 %v906, %v906
      %v919 = vmul.f32 %v907, %v907
      %v920 = vmul.f32 %v908, %v908
      %v921 = vadd.f32 %v863, %v917
      %v922 = vadd.f32 %v864, %v918
      %v923 = vadd.f32 %v865, %v919
      %v924 = vadd.f32 %v866, %v920
      %v925 = vld [vmem:[%s478] sm:$0xff]
      %v926 = vld [vmem:[%s478 + $0x8] sm:$0xff]
      %v927 = vld [vmem:[%s478 + $0x10] sm:$0xff]
      %v928 = vld [vmem:[%s478 + $0x18] sm:$0xff]
      %s929 = scalar_lea.vmem %s2, 5
      %v930 = vld [vmem:[%s929] ss:$8 sm:$0xf]
      %v931 = vsub.f32 %v706, %v603
      %v932 = vsub.f32 %v705, %v604
      %v933 = vsub.f32 %v704, %v605
      %v934 = vsub.f32 %v707, %v606
      %v936 = vperm.slane %v930, 0
      %v937 = vperm.slane %v930, 1
      %v938 = vperm.slane %v930, 2
      %v939 = vperm.slane %v930, 3
      %v944 = vmul.f32 %v936, %v931
      %v945 = vmul.f32 %v937, %v932
      %v946 = vmul.f32 %v938, %v933
      %v947 = vmul.f32 %v939, %v934
      %v948 = vadd.f32 %v603, %v944
      %v949 = vadd.f32 %v604, %v945
      %v950 = vadd.f32 %v605, %v946
      %v951 = vadd.f32 %v606, %v947
      %v952 = vadd.f32 %v925, %v948
      %v953 = vadd.f32 %v926, %v949
      %v954 = vadd.f32 %v927, %v950
      %v955 = vadd.f32 %v928, %v951
      %956 = vst [vmem:[%s478] sm:$0xff] %v952
      %957 = vst [vmem:[%s478 + $0x8] sm:$0xff] %v953
      %958 = vst [vmem:[%s478 + $0x10] sm:$0xff] %v954
      %959 = vst [vmem:[%s478 + $0x18] sm:$0xff] %v955
      %v960 = vadd.f32 %v913, %v952
      %v961 = vadd.f32 %v914, %v953
      %v962 = vadd.f32 %v915, %v954
      %v963 = vadd.f32 %v916, %v955
      %v964 = vmul.f32 %v952, %v952
      %v965 = vmul.f32 %v953, %v953
      %v966 = vmul.f32 %v954, %v954
      %v967 = vmul.f32 %v955, %v955
      %v968 = vadd.f32 %v921, %v964
      %v969 = vadd.f32 %v922, %v965
      %v970 = vadd.f32 %v923, %v966
      %v971 = vadd.f32 %v924, %v967
      %v972 = vld [vmem:[%s483] sm:$0xff]
      %v973 = vld [vmem:[%s483 + $0x8] sm:$0xff]
      %v974 = vld [vmem:[%s483 + $0x10] sm:$0xff]
      %v975 = vld [vmem:[%s483 + $0x18] sm:$0xff]
      %v976 = vld [vmem:[%s929] ss:$8 sm:$0xf]
      %v977 = vsub.f32 %v765, %v663
      %v978 = vsub.f32 %v764, %v664
      %v979 = vsub.f32 %v763, %v665
      %v980 = vsub.f32 %v766, %v666
      %v982 = vperm.slane %v976, 0
      %v983 = vperm.slane %v976, 1
      %v984 = vperm.slane %v976, 2
      %v985 = vperm.slane %v976, 3
      %v990 = vmul.f32 %v982, %v977
      %v991 = vmul.f32 %v983, %v978
      %v992 = vmul.f32 %v984, %v979
      %v993 = vmul.f32 %v985, %v980
      %v994 = vadd.f32 %v663, %v990
      %v995 = vadd.f32 %v664, %v991
      %v996 = vadd.f32 %v665, %v992
      %v997 = vadd.f32 %v666, %v993
      %v998 = vadd.f32 %v972, %v994
      %v999 = vadd.f32 %v973, %v995
      %v1000 = vadd.f32 %v974, %v996
      %v1001 = vadd.f32 %v975, %v997
      %1002 = vst [vmem:[%s483] sm:$0xff] %v998
      %1003 = vst [vmem:[%s483 + $0x8] sm:$0xff] %v999
      %1004 = vst [vmem:[%s483 + $0x10] sm:$0xff] %v1000
      %1005 = vst [vmem:[%s483 + $0x18] sm:$0xff] %v1001
      %v1006 = vadd.f32 %v960, %v998
      %v1007 = vadd.f32 %v961, %v999
      %v1008 = vadd.f32 %v962, %v1000
      %v1009 = vadd.f32 %v963, %v1001
      %v1010 = vmul.f32 %v998, %v998
      %v1011 = vmul.f32 %v999, %v999
      %v1012 = vmul.f32 %v1000, %v1000
      %v1013 = vmul.f32 %v1001, %v1001
      %v1014 = vadd.f32 %v968, %v1010
      %v1015 = vadd.f32 %v969, %v1011
      %v1016 = vadd.f32 %v970, %v1012
      %v1017 = vadd.f32 %v971, %v1013
      %v1018 = vld [vmem:[%s488] sm:$0xff]
      %v1019 = vld [vmem:[%s488 + $0x8] sm:$0xff]
      %v1020 = vld [vmem:[%s488 + $0x10] sm:$0xff]
      %v1021 = vld [vmem:[%s488 + $0x18] sm:$0xff]
      %v1022 = vld [vmem:[%s929] ss:$8 sm:$0xf]
      %v1023 = vsub.f32 %v823, %v639
      %v1024 = vsub.f32 %v822, %v640
      %v1025 = vsub.f32 %v821, %v641
      %v1026 = vsub.f32 %v824, %v642
      %v1028 = vperm.slane %v1022, 0
      %v1029 = vperm.slane %v1022, 1
      %v1030 = vperm.slane %v1022, 2
      %v1031 = vperm.slane %v1022, 3
      %v1036 = vmul.f32 %v1028, %v1023
      %v1037 = vmul.f32 %v1029, %v1024
      %v1038 = vmul.f32 %v1030, %v1025
      %v1039 = vmul.f32 %v1031, %v1026
      %v1040 = vadd.f32 %v639, %v1036
      %v1041 = vadd.f32 %v640, %v1037
      %v1042 = vadd.f32 %v641, %v1038
      %v1043 = vadd.f32 %v642, %v1039
      %v1044 = vadd.f32 %v1018, %v1040
      %v1045 = vadd.f32 %v1019, %v1041
      %v1046 = vadd.f32 %v1020, %v1042
      %v1047 = vadd.f32 %v1021, %v1043
      %1048 = vst [vmem:[%s488] sm:$0xff] %v1044
      %1049 = vst [vmem:[%s488 + $0x8] sm:$0xff] %v1045
      %1050 = vst [vmem:[%s488 + $0x10] sm:$0xff] %v1046
      %1051 = vst [vmem:[%s488 + $0x18] sm:$0xff] %v1047
      %v1052 = vadd.f32 %v1006, %v1044
      %v1053 = vadd.f32 %v1007, %v1045
      %v1054 = vadd.f32 %v1008, %v1046
      %v1055 = vadd.f32 %v1009, %v1047
      %v1056 = vmul.f32 %v1044, %v1044
      %v1057 = vmul.f32 %v1045, %v1045
      %v1058 = vmul.f32 %v1046, %v1046
      %v1059 = vmul.f32 %v1047, %v1047
      %v1060 = vadd.f32 %v1014, %v1056
      %v1061 = vadd.f32 %v1015, %v1057
      %v1062 = vadd.f32 %v1016, %v1058
      %v1063 = vadd.f32 %v1017, %v1059
      %v1064 = vld [vmem:[%s493] sm:$0xff]
      %v1065 = vld [vmem:[%s493 + $0x8] sm:$0xff]
      %v1066 = vld [vmem:[%s493 + $0x10] sm:$0xff]
      %v1067 = vld [vmem:[%s493 + $0x18] sm:$0xff]
      %v1068 = vld [vmem:[%s929] ss:$8 sm:$0xf]
      %v1069 = vsub.f32 %v881, %v687
      %v1070 = vsub.f32 %v880, %v688
      %v1071 = vsub.f32 %v879, %v689
      %v1072 = vsub.f32 %v882, %v690
      %v1074 = vperm.slane %v1068, 0
      %v1075 = vperm.slane %v1068, 1
      %v1076 = vperm.slane %v1068, 2
      %v1077 = vperm.slane %v1068, 3
      %v1082 = vmul.f32 %v1074, %v1069
      %v1083 = vmul.f32 %v1075, %v1070
      %v1084 = vmul.f32 %v1076, %v1071
      %v1085 = vmul.f32 %v1077, %v1072
      %v1086 = vadd.f32 %v687, %v1082
      %v1087 = vadd.f32 %v688, %v1083
      %v1088 = vadd.f32 %v689, %v1084
      %v1089 = vadd.f32 %v690, %v1085
      %v1090 = vadd.f32 %v1064, %v1086
      %v1091 = vadd.f32 %v1065, %v1087
      %v1092 = vadd.f32 %v1066, %v1088
      %v1093 = vadd.f32 %v1067, %v1089
      %1094 = vst [vmem:[%s493] sm:$0xff] %v1090
      %1095 = vst [vmem:[%s493 + $0x8] sm:$0xff] %v1091
      %1096 = vst [vmem:[%s493 + $0x10] sm:$0xff] %v1092
      %1097 = vst [vmem:[%s493 + $0x18] sm:$0xff] %v1093
      %v1098 = vadd.f32 %v1052, %v1090
      %v1099 = vadd.f32 %v1053, %v1091
      %v1100 = vadd.f32 %v1054, %v1092
      %v1101 = vadd.f32 %v1055, %v1093
      %v1102 = vmul.f32 %v1090, %v1090
      %v1103 = vmul.f32 %v1091, %v1091
      %v1104 = vmul.f32 %v1092, %v1092
      %v1105 = vmul.f32 %v1093, %v1093
      %v1106 = vadd.f32 %v1060, %v1102
      %v1107 = vadd.f32 %v1061, %v1103
      %v1108 = vadd.f32 %v1062, %v1104
      %v1109 = vadd.f32 %v1063, %v1105
      %v1110 = vadd.f32 %v1098, %v1099
      %v1111 = vadd.f32 %v1110, %v1100
      %v1112 = vadd.f32 %v1111, %v1101
      %1113 = vadd.xlane.f32.xlu0 %v1112
      %v1114 = vpop.xlane.xlu0 %1113
      %v1115 = vrot.slane %v1114, 4
      %v1116 = vadd.f32 %v1114, %v1115
      %v1117 = vrot.slane %v1116, 2
      %v1118 = vadd.f32 %v1116, %v1117
      %v1119 = vrot.slane %v1118, 1
      %v1120 = vadd.f32 %v1118, %v1119
      %s1121 = vtos %v1120
      %s1122 = smul.f32 %s1121, 3.0517578e-05
      %v1123 = vadd.f32 %v1106, %v1107
      %v1124 = vadd.f32 %v1123, %v1108
      %v1125 = vadd.f32 %v1124, %v1109
      %1126 = vadd.xlane.f32.xlu0 %v1125
      %v1127 = vpop.xlane.xlu0 %1126
      %v1128 = vrot.slane %v1127, 4
      %v1129 = vadd.f32 %v1127, %v1128
      %v1130 = vrot.slane %v1129, 2
      %v1131 = vadd.f32 %v1129, %v1130
      %v1132 = vrot.slane %v1131, 1
      %v1133 = vadd.f32 %v1131, %v1132
      %s1134 = vtos %v1133
      %s1135 = smul.f32 %s1134, 3.0517578e-05
      %s1136 = smul.f32 %s1122, %s1122
      %s1137 = ssub.f32 %s1135, %s1136
      %s1138 = sadd.f32 %s1137, 1e-05
      %v1139 = vstv %s1138
      %v1140 = vrsqrt.pop %v1139
      %v1141 = vmul.f32 %v1140, %v1139
      %v1142 = vmul.f32 %v1141, %v1140
      %v1143 = vmul.f32 0.5, %v1142
      %v1144 = vsub.f32 1.5, %v1143
      %v1145 = vmul.f32 %v1140, %v1144
      %vm1146 = vweird.f32 %v1139
      %vm1147 = vweird.f32 %v1140
      %vm1148 = vmor %vm1146, %vm1147
      %v1149 = vsel %vm1148, %v1140, %v1145
      %s1150 = vtos %v1149
      %v1151 = vld [vmem:[%s3] sm:$0xff]
      %v1152 = vstv %s1150
      %v1153 = vmul.f32 %v1151, %v1152
      %v1154 = vld [vmem:[%s4] sm:$0xff]
      %v1155 = vstv %s1122
      %v1156 = vmul.f32 %v1155, %v1153
      %v1157 = vsub.f32 %v1154, %v1156
      %1159 = vset.pattern.permute.xlu0 0
      %1160 = vperm.xlu0 %1159, %v1153
      %v1161 = vpop.permute.xlu0 %1160
      %1164 = vset.pattern.permute.xlu0 0
      %1165 = vperm.xlu0 %1164, %v1157
      %v1166 = vpop.permute.xlu0 %1165
      %v1168 = vld [vmem:[%s224] sm:$0xff]
      %v1169 = vld [vmem:[%s224 + $0x8] sm:$0xff]
      %v1170 = vld [vmem:[%s224 + $0x10] sm:$0xff]
      %v1171 = vld [vmem:[%s224 + $0x18] sm:$0xff]
      %v1172 = vmul.f32 %v1168, %v1161
      %v1173 = vmul.f32 %v1169, %v1161
      %v1174 = vmul.f32 %v1170, %v1161
      %v1175 = vmul.f32 %v1171, %v1161
      %v1176 = vadd.f32 %v1172, %v1166
      %v1177 = vadd.f32 %v1173, %v1166
      %v1178 = vadd.f32 %v1174, %v1166
      %v1179 = vadd.f32 %v1175, %v1166
      %v1180 = vmax.f32 %v1176, 0.0
      %v1181 = vmax.f32 %v1177, 0.0
      %v1182 = vmax.f32 %v1178, 0.0
      %v1183 = vmax.f32 %v1179, 0.0
      %v1184 = vmin.f32 %v1180, 6.0
      %v1185 = vmin.f32 %v1181, 6.0
      %v1186 = vmin.f32 %v1182, 6.0
      %v1187 = vmin.f32 %v1183, 6.0
      %1188 = vst [vmem:[%s224] sm:$0xff] %v1184
      %1189 = vst [vmem:[%s224 + $0x8] sm:$0xff] %v1185
      %1190 = vst [vmem:[%s224 + $0x10] sm:$0xff] %v1186
      %1191 = vst [vmem:[%s224 + $0x18] sm:$0xff] %v1187
      %v1192 = vld [vmem:[%s463] sm:$0xff]
      %v1193 = vld [vmem:[%s463 + $0x8] sm:$0xff]
      %v1194 = vld [vmem:[%s463 + $0x10] sm:$0xff]
      %v1195 = vld [vmem:[%s463 + $0x18] sm:$0xff]
      %v1196 = vmul.f32 %v1192, %v1161
      %v1197 = vmul.f32 %v1193, %v1161
      %v1198 = vmul.f32 %v1194, %v1161
      %v1199 = vmul.f32 %v1195, %v1161
      %v1200 = vadd.f32 %v1196, %v1166
      %v1201 = vadd.f32 %v1197, %v1166
      %v1202 = vadd.f32 %v1198, %v1166
      %v1203 = vadd.f32 %v1199, %v1166
      %v1204 = vmax.f32 %v1200, 0.0
      %v1205 = vmax.f32 %v1201, 0.0
      %v1206 = vmax.f32 %v1202, 0.0
      %v1207 = vmax.f32 %v1203, 0.0
      %v1208 = vmin.f32 %v1204, 6.0
      %v1209 = vmin.f32 %v1205, 6.0
      %v1210 = vmin.f32 %v1206, 6.0
      %v1211 = vmin.f32 %v1207, 6.0
      %1212 = vst [vmem:[%s463] sm:$0xff] %v1208
      %1213 = vst [vmem:[%s463 + $0x8] sm:$0xff] %v1209
      %1214 = vst [vmem:[%s463 + $0x10] sm:$0xff] %v1210
      %1215 = vst [vmem:[%s463 + $0x18] sm:$0xff] %v1211
      %v1216 = vld [vmem:[%s468] sm:$0xff]
      %v1217 = vld [vmem:[%s468 + $0x8] sm:$0xff]
      %v1218 = vld [vmem:[%s468 + $0x10] sm:$0xff]
      %v1219 = vld [vmem:[%s468 + $0x18] sm:$0xff]
      %v1220 = vmul.f32 %v1216, %v1161
      %v1221 = vmul.f32 %v1217, %v1161
      %v1222 = vmul.f32 %v1218, %v1161
      %v1223 = vmul.f32 %v1219, %v1161
      %v1224 = vadd.f32 %v1220, %v1166
      %v1225 = vadd.f32 %v1221, %v1166
      %v1226 = vadd.f32 %v1222, %v1166
      %v1227 = vadd.f32 %v1223, %v1166
      %v1228 = vmax.f32 %v1224, 0.0
      %v1229 = vmax.f32 %v1225, 0.0
      %v1230 = vmax.f32 %v1226, 0.0
      %v1231 = vmax.f32 %v1227, 0.0
      %v1232 = vmin.f32 %v1228, 6.0
      %v1233 = vmin.f32 %v1229, 6.0
      %v1234 = vmin.f32 %v1230, 6.0
      %v1235 = vmin.f32 %v1231, 6.0
      %1236 = vst [vmem:[%s468] sm:$0xff] %v1232
      %1237 = vst [vmem:[%s468 + $0x8] sm:$0xff] %v1233
      %1238 = vst [vmem:[%s468 + $0x10] sm:$0xff] %v1234
      %1239 = vst [vmem:[%s468 + $0x18] sm:$0xff] %v1235
      %v1240 = vld [vmem:[%s473] sm:$0xff]
      %v1241 = vld [vmem:[%s473 + $0x8] sm:$0xff]
      %v1242 = vld [vmem:[%s473 + $0x10] sm:$0xff]
      %v1243 = vld [vmem:[%s473 + $0x18] sm:$0xff]
      %v1244 = vmul.f32 %v1240, %v1161
      %v1245 = vmul.f32 %v1241, %v1161
      %v1246 = vmul.f32 %v1242, %v1161
      %v1247 = vmul.f32 %v1243, %v1161
      %v1248 = vadd.f32 %v1244, %v1166
      %v1249 = vadd.f32 %v1245, %v1166
      %v1250 = vadd.f32 %v1246, %v1166
      %v1251 = vadd.f32 %v1247, %v1166
      %v1252 = vmax.f32 %v1248, 0.0
      %v1253 = vmax.f32 %v1249, 0.0
      %v1254 = vmax.f32 %v1250, 0.0
      %v1255 = vmax.f32 %v1251, 0.0
      %v1256 = vmin.f32 %v1252, 6.0
      %v1257 = vmin.f32 %v1253, 6.0
      %v1258 = vmin.f32 %v1254, 6.0
      %v1259 = vmin.f32 %v1255, 6.0
      %1260 = vst [vmem:[%s473] sm:$0xff] %v1256
      %1261 = vst [vmem:[%s473 + $0x8] sm:$0xff] %v1257
      %1262 = vst [vmem:[%s473 + $0x10] sm:$0xff] %v1258
      %1263 = vst [vmem:[%s473 + $0x18] sm:$0xff] %v1259
      %v1264 = vld [vmem:[%s478] sm:$0xff]
      %v1265 = vld [vmem:[%s478 + $0x8] sm:$0xff]
      %v1266 = vld [vmem:[%s478 + $0x10] sm:$0xff]
      %v1267 = vld [vmem:[%s478 + $0x18] sm:$0xff]
      %v1268 = vmul.f32 %v1264, %v1161
      %v1269 = vmul.f32 %v1265, %v1161
      %v1270 = vmul.f32 %v1266, %v1161
      %v1271 = vmul.f32 %v1267, %v1161
      %v1272 = vadd.f32 %v1268, %v1166
      %v1273 = vadd.f32 %v1269, %v1166
      %v1274 = vadd.f32 %v1270, %v1166
      %v1275 = vadd.f32 %v1271, %v1166
      %v1276 = vmax.f32 %v1272, 0.0
      %v1277 = vmax.f32 %v1273, 0.0
      %v1278 = vmax.f32 %v1274, 0.0
      %v1279 = vmax.f32 %v1275, 0.0
      %v1280 = vmin.f32 %v1276, 6.0
      %v1281 = vmin.f32 %v1277, 6.0
      %v1282 = vmin.f32 %v1278, 6.0
      %v1283 = vmin.f32 %v1279, 6.0
      %1284 = vst [vmem:[%s478] sm:$0xff] %v1280
      %1285 = vst [vmem:[%s478 + $0x8] sm:$0xff] %v1281
      %1286 = vst [vmem:[%s478 + $0x10] sm:$0xff] %v1282
      %1287 = vst [vmem:[%s478 + $0x18] sm:$0xff] %v1283
      %v1288 = vld [vmem:[%s483] sm:$0xff]
      %v1289 = vld [vmem:[%s483 + $0x8] sm:$0xff]
      %v1290 = vld [vmem:[%s483 + $0x10] sm:$0xff]
      %v1291 = vld [vmem:[%s483 + $0x18] sm:$0xff]
      %v1292 = vmul.f32 %v1288, %v1161
      %v1293 = vmul.f32 %v1289, %v1161
      %v1294 = vmul.f32 %v1290, %v1161
      %v1295 = vmul.f32 %v1291, %v1161
      %v1296 = vadd.f32 %v1292, %v1166
      %v1297 = vadd.f32 %v1293, %v1166
      %v1298 = vadd.f32 %v1294, %v1166
      %v1299 = vadd.f32 %v1295, %v1166
      %v1300 = vmax.f32 %v1296, 0.0
      %v1301 = vmax.f32 %v1297, 0.0
      %v1302 = vmax.f32 %v1298, 0.0
      %v1303 = vmax.f32 %v1299, 0.0
      %v1304 = vmin.f32 %v1300, 6.0
      %v1305 = vmin.f32 %v1301, 6.0
      %v1306 = vmin.f32 %v1302, 6.0
      %v1307 = vmin.f32 %v1303, 6.0
      %1308 = vst [vmem:[%s483] sm:$0xff] %v1304
      %1309 = vst [vmem:[%s483 + $0x8] sm:$0xff] %v1305
      %1310 = vst [vmem:[%s483 + $0x10] sm:$0xff] %v1306
      %1311 = vst [vmem:[%s483 + $0x18] sm:$0xff] %v1307
      %v1312 = vld [vmem:[%s488] sm:$0xff]
      %v1313 = vld [vmem:[%s488 + $0x8] sm:$0xff]
      %v1314 = vld [vmem:[%s488 + $0x10] sm:$0xff]
      %v1315 = vld [vmem:[%s488 + $0x18] sm:$0xff]
      %v1316 = vmul.f32 %v1312, %v1161
      %v1317 = vmul.f32 %v1313, %v1161
      %v1318 = vmul.f32 %v1314, %v1161
      %v1319 = vmul.f32 %v1315, %v1161
      %v1320 = vadd.f32 %v1316, %v1166
      %v1321 = vadd.f32 %v1317, %v1166
      %v1322 = vadd.f32 %v1318, %v1166
      %v1323 = vadd.f32 %v1319, %v1166
      %v1324 = vmax.f32 %v1320, 0.0
      %v1325 = vmax.f32 %v1321, 0.0
      %v1326 = vmax.f32 %v1322, 0.0
      %v1327 = vmax.f32 %v1323, 0.0
      %v1328 = vmin.f32 %v1324, 6.0
      %v1329 = vmin.f32 %v1325, 6.0
      %v1330 = vmin.f32 %v1326, 6.0
      %v1331 = vmin.f32 %v1327, 6.0
      %1332 = vst [vmem:[%s488] sm:$0xff] %v1328
      %1333 = vst [vmem:[%s488 + $0x8] sm:$0xff] %v1329
      %1334 = vst [vmem:[%s488 + $0x10] sm:$0xff] %v1330
      %1335 = vst [vmem:[%s488 + $0x18] sm:$0xff] %v1331
      %v1336 = vld [vmem:[%s493] sm:$0xff]
      %v1337 = vld [vmem:[%s493 + $0x8] sm:$0xff]
      %v1338 = vld [vmem:[%s493 + $0x10] sm:$0xff]
      %v1339 = vld [vmem:[%s493 + $0x18] sm:$0xff]
      %v1340 = vmul.f32 %v1336, %v1161
      %v1341 = vmul.f32 %v1337, %v1161
      %v1342 = vmul.f32 %v1338, %v1161
      %v1343 = vmul.f32 %v1339, %v1161
      %v1344 = vadd.f32 %v1340, %v1166
      %v1345 = vadd.f32 %v1341, %v1166
      %v1346 = vadd.f32 %v1342, %v1166
      %v1347 = vadd.f32 %v1343, %v1166
      %v1348 = vmax.f32 %v1344, 0.0
      %v1349 = vmax.f32 %v1345, 0.0
      %v1350 = vmax.f32 %v1346, 0.0
      %v1351 = vmax.f32 %v1347, 0.0
      %v1352 = vmin.f32 %v1348, 6.0
      %v1353 = vmin.f32 %v1349, 6.0
      %v1354 = vmin.f32 %v1350, 6.0
      %v1355 = vmin.f32 %v1351, 6.0
      %1356 = vst [vmem:[%s493] sm:$0xff] %v1352
      %1357 = vst [vmem:[%s493 + $0x8] sm:$0xff] %v1353
      %1358 = vst [vmem:[%s493 + $0x10] sm:$0xff] %v1354
      %1359 = vst [vmem:[%s493 + $0x18] sm:$0xff] %v1355
      %p1360 = scmp.lt.s32.totalorder %s16, 1
      %s1361 = scalar_select %p1360, %s16, 1
      %s1362 = smul.addr %s1361, 32
      %s1363 = smul.addr %s1362, 8
      %s1364 = scalar_lea.vmem %s5, %s1363
      // Predicated region
      $region41: #{multi_decoder3d.1} parent=39 // pred_check
        %p1365 = pneg %p144
      $region42: #{multi_decoder3d.1} parent=39 // pred_check_branch
        %1367 = sbr.rel (%p1365) target = $region44
      $region43: #{multi_decoder3d.1} parent=39 // pred_region
        _
      $region44: #{multi_decoder3d.1} parent=39 // pred_fallthru
        _
    $region40: #{multi_decoder3d.1} parent=5 // pred_fallthru
      _
    %p1368 = scmp.le.s32.totalorder 2, %s11
    // Predicated region
    $region45: #{multi_decoder3d.1} parent=5 // pred_check
      %p1369 = pneg %p1368
    $region46: #{multi_decoder3d.1} parent=5 // pred_check_branch
      %1371 = sbr.rel (%p1369) target = $region48
    $region47: #{multi_decoder3d.1} parent=5 // pred_region
      %s1372 = ssub.s32 %s11, 2
      // Predicated region
      $region49: #{multi_decoder3d.1} parent=47 // pred_check
        %p1373 = pneg %p150
      $region50: #{multi_decoder3d.1} parent=47 // pred_check_branch
        %1375 = sbr.rel (%p1373) target = $region52
      $region51: #{multi_decoder3d.1} parent=47 // pred_region
        %p1376 = scmp.lt.s32.totalorder %s17, 1
        %s1377 = scalar_select %p1376, %s17, 1
        %s1378 = smul.addr %s1377, 32
        %s1379 = smul.addr %s1378, 8
        %s1380 = scalar_lea.vmem %s5, %s1379
      $region52: #{multi_decoder3d.1} parent=47 // pred_fallthru
        _
    $region48: #{multi_decoder3d.1} parent=5 // pred_fallthru
      _
  $region6: #{multi_decoder3d.1} parent=0 // loop_footer
    %s15 = sadd.s32 1, %s11
  $region7: #{multi_decoder3d.1} parent=0 // loop_footer_branch
    %10 = sbr.rel target = $region3
  $region8: #{multi_decoder3d.1} parent=0 // loop_exit
    _

</llo_original>
